<compile_context>
chip_gen: v6e
topology: v6e:2x2x1
jax: 0.10.0
libtpu: 0.0.40
codegen_flags: <defaults>
</compile_context>

<pallas_src>
import functools

import jax
import jax.numpy as jnp
import numpy as np
from jax import lax
from jax.experimental import pallas as pl
from jax.experimental.pallas import tpu as pltpu


def _pool_stats_kernel(x_ref, invcnt_ref, y_ref, stats_ref, *,
                       pool_type, k, stride, Ho, Wo):
    """Pool one batch block and emit per-channel partial BN statistics.

    x_ref     : (s*s, nb, Hq, Wq, C) phase-decomposed, spatially padded input (VMEM)
    invcnt_ref: (Ho, Wo, 1)          1 / valid-window-count (avg only; unused for max)
    y_ref     : (nb, Ho, Wo, C)      pooled output block
    stats_ref : (1, 2, C)            [sum, sum_of_squares] over this block
    """
    C = y_ref.shape[-1]
    acc = None
    for ki in range(k):
        for kj in range(k):
            pidx = (ki % stride) * stride + (kj % stride)
            h0, w0 = ki // stride, kj // stride
            sl = x_ref[pidx, :, h0:h0 + Ho, w0:w0 + Wo, :].astype(jnp.float32)
            if acc is None:
                acc = sl
            elif pool_type == "max":
                acc = jnp.maximum(acc, sl)
            else:
                acc = acc + sl
    if pool_type == "avg":
        # AvgPool2d(count_include_pad=False): padded zeros were summed, divide by
        # the number of valid (non-pad) elements of each window.
        acc = acc * invcnt_ref[...][None, :, :, :]

    y_ref[...] = acc.astype(y_ref.dtype)

    s_c = jnp.sum(acc, axis=(0, 1, 2), keepdims=True).reshape(1, C)
    ss_c = jnp.sum(acc * acc, axis=(0, 1, 2), keepdims=True).reshape(1, C)
    stats_ref[0, :, :] = jnp.concatenate([s_c, ss_c], axis=0)


def _bn_apply_kernel(y_ref, sb_ref, o_ref):
    """out = y * scale + shift (per channel)  ==  (y - mean) * rsqrt(var + eps)."""
    C = y_ref.shape[-1]
    scale = sb_ref[0:1, :].reshape(1, 1, 1, C)
    shift = sb_ref[1:2, :].reshape(1, 1, 1, C)
    o_ref[...] = (y_ref[...] * scale + shift).astype(o_ref.dtype)


def pool_bn_forward(x_nchw, *, pool_type, kernel_size, stride, padding,
                    eps=1e-5, batch_block=None):
    """PoolBN forward. x_nchw: (N, C, H, W) float32. Returns (N, C, Ho, Wo)."""
    pool_type = pool_type.lower()
    if pool_type not in ("max", "avg"):
        raise ValueError("pool_type must be 'max' or 'avg'")

    N, C, H, W = x_nchw.shape
    k, s, p = kernel_size, stride, padding
    Ho = (H + 2 * p - k) // s + 1
    Wo = (W + 2 * p - k) // s + 1

    # ---- glue: layout, padding, static index math (plain JAX / numpy) ----
    x_nhwc = jnp.transpose(x_nchw, (0, 2, 3, 1)).astype(jnp.float32)
    pad_val = float(np.finfo(np.float32).min) if pool_type == "max" else 0.0
    Hq = -(-(H + 2 * p) // s)           # ceil((H + 2p) / s)
    Wq = -(-(W + 2 * p) // s)
    x_pad = jnp.pad(
        x_nhwc,
        ((0, 0), (p, Hq * s - H - p), (p, Wq * s - W - p), (0, 0)),
        constant_values=pad_val)
    # Phase decomposition: xp[pi*s + pj] == x_pad[:, pi::s, pj::s, :].
    # The pooling stride is paid once here (cheap XLA relayout); every in-kernel
    # tap slice becomes a unit-stride window.
    xp = (x_pad.reshape(N, Hq, s, Wq, s, C)
               .transpose(2, 4, 0, 1, 3, 5)
               .reshape(s * s, N, Hq, Wq, C))

    # 1 / (#valid elements per window): AvgPool count_include_pad=False divisor.
    hs = np.arange(Ho) * s - p
    ws = np.arange(Wo) * s - p
    cnt_h = np.clip(hs + k, 0, H) - np.clip(hs, 0, H)
    cnt_w = np.clip(ws + k, 0, W) - np.clip(ws, 0, W)
    inv_cnt = jnp.asarray(
        (1.0 / (cnt_h[:, None] * cnt_w[None, :])).astype(np.float32))[:, :, None]

    # Batch-block size: largest divisor of N whose padded input block stays <= ~2 MiB
    # (keeps double-buffered in+out comfortably inside scoped VMEM on v5e/v6e/v7x).
    per_img_bytes = s * s * Hq * Wq * C * 4
    if batch_block is None:
        batch_block = 1
        for d in range(1, N + 1):
            if N % d == 0 and d * per_img_bytes <= 2 * 1024 * 1024:
                batch_block = d
    assert N % batch_block == 0, "batch_block must divide N"
    nb = batch_block
    G = N // nb

    pool_kernel = functools.partial(
        _pool_stats_kernel, pool_type=pool_type, k=k, stride=s, Ho=Ho, Wo=Wo)

    # ---- pass 1: pool + per-block per-channel partial stats ----
    y, stats = pl.pallas_call(
        pool_kernel,
        grid=(G,),
        out_shape=(
            jax.ShapeDtypeStruct((N, Ho, Wo, C), jnp.float32),
            jax.ShapeDtypeStruct((G, 2, C), jnp.float32),
        ),
        in_specs=[
            pl.BlockSpec((s * s, nb, Hq, Wq, C), lambda i: (0, i, 0, 0, 0)),
            pl.BlockSpec((Ho, Wo, 1), lambda i: (0, 0, 0)),
        ],
        out_specs=(
            pl.BlockSpec((nb, Ho, Wo, C), lambda i: (i, 0, 0, 0)),
            pl.BlockSpec((1, 2, C), lambda i: (i, 0, 0)),
        ),
        compiler_params=pltpu.CompilerParams(dimension_semantics=("parallel",)),
        cost_estimate=pl.CostEstimate(
            flops=int(N * Ho * Wo * C * (k * k + 4)),
            transcendentals=0,
            bytes_accessed=int(xp.size * 4 + N * Ho * Wo * C * 4 + G * 2 * C * 4)),
    )(xp, inv_cnt)

    # ---- finalize BN batch statistics (tiny per-channel vectors, plain XLA) ----
    # TODO(synk): BatchNorm2d running_mean/var momentum update (module buffer state)
    # is not modeled; only the training-mode normalized output is returned.
    tot = jnp.sum(stats, axis=0)                           # (2, C)
    cnt = float(N * Ho * Wo)
    mean = tot[0] / cnt
    var = jnp.maximum(tot[1] / cnt - mean * mean, 0.0)     # biased var (training mode)
    inv_std = lax.rsqrt(var + eps)
    sb = jnp.stack([inv_std, -mean * inv_std]).astype(jnp.float32)   # (2, C)

    # ---- pass 2: stream y back through and normalize (in place via aliasing) ----
    out_nhwc = pl.pallas_call(
        _bn_apply_kernel,
        grid=(G,),
        out_shape=jax.ShapeDtypeStruct((N, Ho, Wo, C), jnp.float32),
        in_specs=[
            pl.BlockSpec((nb, Ho, Wo, C), lambda i: (i, 0, 0, 0)),
            pl.BlockSpec((2, C), lambda i: (0, 0)),
        ],
        out_specs=pl.BlockSpec((nb, Ho, Wo, C), lambda i: (i, 0, 0, 0)),
        compiler_params=pltpu.CompilerParams(dimension_semantics=("parallel",)),
        input_output_aliases={0: 0},
        cost_estimate=pl.CostEstimate(
            flops=int(2 * N * Ho * Wo * C),
            transcendentals=0,
            bytes_accessed=int(2 * N * Ho * Wo * C * 4)),
    )(y, sb)

    return jnp.transpose(out_nhwc, (0, 3, 1, 2))   # back to NCHW


def _reference(x_nchw, *, pool_type, kernel_size, stride, padding, eps=1e-5):
    """Pure-JAX reference matching PyTorch PoolBN.forward in training mode."""
    k, s, p = kernel_size, stride, padding
    pads = [(0, 0), (0, 0), (p, p), (p, p)]
    if pool_type == "max":
        y = lax.reduce_window(x_nchw, -jnp.inf, lax.max,
                              (1, 1, k, k), (1, 1, s, s), pads)
    else:
        total = lax.reduce_window(x_nchw, 0.0, lax.add,
                                  (1, 1, k, k), (1, 1, s, s), pads)
        count = lax.reduce_window(jnp.ones_like(x_nchw), 0.0, lax.add,
                                  (1, 1, k, k), (1, 1, s, s), pads)
        y = total / count
    mean = jnp.mean(y, axis=(0, 2, 3), keepdims=True)
    var = jnp.mean(jnp.square(y - mean), axis=(0, 2, 3), keepdims=True)
    return (y - mean) * lax.rsqrt(var + eps)


if __name__ == "__main__":
    N, C, H, W = 2, 4, 16, 16
    x = jax.random.normal(jax.random.PRNGKey(0), (N, C, H, W), dtype=jnp.float32)

    # (pool_type, kernel, stride, padding, batch_block) — DARTS max/avg_pool_3x3,
    # both normal (stride 1) and reduction (stride 2) variants.
    configs = [
        ("max", 3, 1, 1, 1),      # grid of N blocks (exercises index maps)
        ("avg", 3, 1, 1, 1),
        ("max", 3, 2, 1, None),   # auto batch-block
        ("avg", 3, 2, 1, None),
    ]
    for pool_type, k, s, p, bb in configs:
        fwd = jax.jit(functools.partial(
            pool_bn_forward, pool_type=pool_type, kernel_size=k, stride=s,
            padding=p, batch_block=bb))
        out = jax.block_until_ready(fwd(x))
        ref = _reference(x, pool_type=pool_type, kernel_size=k, stride=s, padding=p)
        np.testing.assert_allclose(np.asarray(out), np.asarray(ref),
                                   atol=1e-3, rtol=1e-3)

    print("KERNEL_OK")
</pallas_src>

<mosaic_0001>
module attributes {stable_mosaic.version = 11 : i64} {
  func.func @_pool_stats_kernel(%arg0: i32, %arg1: memref<1x1x18x18x4xf32, #tpu.memory_space<vmem>>, %arg2: memref<16x16x1xf32, #tpu.memory_space<vmem>>, %arg3: memref<1x16x16x4xf32, #tpu.memory_space<vmem>>, %arg4: memref<1x2x4xf32, #tpu.memory_space<vmem>>) attributes {dimension_semantics = [#tpu.dimension_semantics<parallel>], iteration_bounds = array<i64: 2>, scalar_prefetch = 0 : i64, scratch_operands = 0 : i64, tpu.core_type = #tpu.core_type<tc>, window_params = [{transform_indices = @transform_0, window_bounds = array<i64: 1, 1, 18, 18, 4>}, {pipeline_mode = #tpu.pipeline_mode<synchronous>, transform_indices = @transform_1, window_bounds = array<i64: 16, 16, 1>}, {transform_indices = @transform_2, window_bounds = array<i64: 1, 16, 16, 4>}, {transform_indices = @transform_3, window_bounds = array<i64: 1, 2, 4>}]} {
    %c0 = arith.constant 0 : index
    %c0_0 = arith.constant 0 : index
    %c0_1 = arith.constant 0 : index
    %c0_2 = arith.constant 0 : index
    %c0_3 = arith.constant 0 : index
    %0 = vector.load %arg1[%c0, %c0_0, %c0_1, %c0_2, %c0_3] : memref<1x1x18x18x4xf32, #tpu.memory_space<vmem>>, vector<1x1x16x16x4xf32>
    %1 = vector.shape_cast %0 : vector<1x1x16x16x4xf32> to vector<1x16x16x4xf32>
    %c0_4 = arith.constant 0 : index
    %c0_5 = arith.constant 0 : index
    %c0_6 = arith.constant 0 : index
    %c1 = arith.constant 1 : index
    %c0_7 = arith.constant 0 : index
    %2 = vector.load %arg1[%c0_4, %c0_5, %c0_6, %c1, %c0_7] : memref<1x1x18x18x4xf32, #tpu.memory_space<vmem>>, vector<1x1x16x16x4xf32>
    %3 = vector.shape_cast %2 : vector<1x1x16x16x4xf32> to vector<1x16x16x4xf32>
    %4 = arith.maximumf %1, %3 : vector<1x16x16x4xf32>
    %c0_8 = arith.constant 0 : index
    %c0_9 = arith.constant 0 : index
    %c0_10 = arith.constant 0 : index
    %c2 = arith.constant 2 : index
    %c0_11 = arith.constant 0 : index
    %5 = vector.load %arg1[%c0_8, %c0_9, %c0_10, %c2, %c0_11] : memref<1x1x18x18x4xf32, #tpu.memory_space<vmem>>, vector<1x1x16x16x4xf32>
    %6 = vector.shape_cast %5 : vector<1x1x16x16x4xf32> to vector<1x16x16x4xf32>
    %7 = arith.maximumf %4, %6 : vector<1x16x16x4xf32>
    %c0_12 = arith.constant 0 : index
    %c0_13 = arith.constant 0 : index
    %c1_14 = arith.constant 1 : index
    %c0_15 = arith.constant 0 : index
    %c0_16 = arith.constant 0 : index
    %8 = vector.load %arg1[%c0_12, %c0_13, %c1_14, %c0_15, %c0_16] : memref<1x1x18x18x4xf32, #tpu.memory_space<vmem>>, vector<1x1x16x16x4xf32>
    %9 = vector.shape_cast %8 : vector<1x1x16x16x4xf32> to vector<1x16x16x4xf32>
    %10 = arith.maximumf %7, %9 : vector<1x16x16x4xf32>
    %c0_17 = arith.constant 0 : index
    %c0_18 = arith.constant 0 : index
    %c1_19 = arith.constant 1 : index
    %c1_20 = arith.constant 1 : index
    %c0_21 = arith.constant 0 : index
    %11 = vector.load %arg1[%c0_17, %c0_18, %c1_19, %c1_20, %c0_21] : memref<1x1x18x18x4xf32, #tpu.memory_space<vmem>>, vector<1x1x16x16x4xf32>
    %12 = vector.shape_cast %11 : vector<1x1x16x16x4xf32> to vector<1x16x16x4xf32>
    %13 = arith.maximumf %10, %12 : vector<1x16x16x4xf32>
    %c0_22 = arith.constant 0 : index
    %c0_23 = arith.constant 0 : index
    %c1_24 = arith.constant 1 : index
    %c2_25 = arith.constant 2 : index
    %c0_26 = arith.constant 0 : index
    %14 = vector.load %arg1[%c0_22, %c0_23, %c1_24, %c2_25, %c0_26] : memref<1x1x18x18x4xf32, #tpu.memory_space<vmem>>, vector<1x1x16x16x4xf32>
    %15 = vector.shape_cast %14 : vector<1x1x16x16x4xf32> to vector<1x16x16x4xf32>
    %16 = arith.maximumf %13, %15 : vector<1x16x16x4xf32>
    %c0_27 = arith.constant 0 : index
    %c0_28 = arith.constant 0 : index
    %c2_29 = arith.constant 2 : index
    %c0_30 = arith.constant 0 : index
    %c0_31 = arith.constant 0 : index
    %17 = vector.load %arg1[%c0_27, %c0_28, %c2_29, %c0_30, %c0_31] : memref<1x1x18x18x4xf32, #tpu.memory_space<vmem>>, vector<1x1x16x16x4xf32>
    %18 = vector.shape_cast %17 : vector<1x1x16x16x4xf32> to vector<1x16x16x4xf32>
    %19 = arith.maximumf %16, %18 : vector<1x16x16x4xf32>
    %c0_32 = arith.constant 0 : index
    %c0_33 = arith.constant 0 : index
    %c2_34 = arith.constant 2 : index
    %c1_35 = arith.constant 1 : index
    %c0_36 = arith.constant 0 : index
    %20 = vector.load %arg1[%c0_32, %c0_33, %c2_34, %c1_35, %c0_36] : memref<1x1x18x18x4xf32, #tpu.memory_space<vmem>>, vector<1x1x16x16x4xf32>
    %21 = vector.shape_cast %20 : vector<1x1x16x16x4xf32> to vector<1x16x16x4xf32>
    %22 = arith.maximumf %19, %21 : vector<1x16x16x4xf32>
    %c0_37 = arith.constant 0 : index
    %c0_38 = arith.constant 0 : index
    %c2_39 = arith.constant 2 : index
    %c2_40 = arith.constant 2 : index
    %c0_41 = arith.constant 0 : index
    %23 = vector.load %arg1[%c0_37, %c0_38, %c2_39, %c2_40, %c0_41] : memref<1x1x18x18x4xf32, #tpu.memory_space<vmem>>, vector<1x1x16x16x4xf32>
    %24 = vector.shape_cast %23 : vector<1x1x16x16x4xf32> to vector<1x16x16x4xf32>
    %25 = arith.maximumf %22, %24 : vector<1x16x16x4xf32>
    %c0_42 = arith.constant 0 : index
    %c0_43 = arith.constant 0 : index
    %c0_44 = arith.constant 0 : index
    %c0_45 = arith.constant 0 : index
    %26 = vector.load %arg3[%c0_42, %c0_43, %c0_44, %c0_45] : memref<1x16x16x4xf32, #tpu.memory_space<vmem>>, vector<1x16x16x4xf32>
    tpu.vector_store %arg3[%c0_42, %c0_43, %c0_44, %c0_45], %25 {strides = array<i32>} : memref<1x16x16x4xf32, #tpu.memory_space<vmem>>, vector<1x16x16x4xf32>,
    %cst = arith.constant dense<0.000000e+00> : vector<4xf32>
    %27 = vector.multi_reduction <add>, %25, %cst [0, 1, 2] : vector<1x16x16x4xf32> to vector<4xf32>
    %28 = vector.shape_cast %27 : vector<4xf32> to vector<1x1x1x4xf32>
    %29 = vector.shape_cast %28 : vector<1x1x1x4xf32> to vector<1x4xf32>
    %30 = arith.mulf %25, %25 : vector<1x16x16x4xf32>
    %cst_46 = arith.constant dense<0.000000e+00> : vector<4xf32>
    %31 = vector.multi_reduction <add>, %30, %cst_46 [0, 1, 2] : vector<1x16x16x4xf32> to vector<4xf32>
    %32 = vector.shape_cast %31 : vector<4xf32> to vector<1x1x1x4xf32>
    %33 = vector.shape_cast %32 : vector<1x1x1x4xf32> to vector<1x4xf32>
    %34 = tpu.concatenate %29, %33 in 0 : vector<1x4xf32>, vector<1x4xf32> -> vector<2x4xf32>
    %c0_47 = arith.constant 0 : index
    %c0_48 = arith.constant 0 : index
    %c0_49 = arith.constant 0 : index
    %35 = vector.load %arg4[%c0_47, %c0_48, %c0_49] : memref<1x2x4xf32, #tpu.memory_space<vmem>>, vector<1x2x4xf32>
    %36 = vector.shape_cast %35 : vector<1x2x4xf32> to vector<2x4xf32>
    %37 = vector.shape_cast %34 : vector<2x4xf32> to vector<1x2x4xf32>
    tpu.vector_store %arg4[%c0_47, %c0_48, %c0_49], %37 {strides = array<i32>} : memref<1x2x4xf32, #tpu.memory_space<vmem>>, vector<1x2x4xf32>,
    return
  }
  func.func @transform_0(%arg0: i32) -> (i32, i32, i32, i32, i32) {
    %c0_i32 = arith.constant 0 : i32
    %c0_i32_0 = arith.constant 0 : i32
    %c0_i32_1 = arith.constant 0 : i32
    %c0_i32_2 = arith.constant 0 : i32
    %c0_i32_3 = arith.constant 0 : i32
    return %c0_i32, %arg0, %c0_i32_0, %c0_i32_1, %c0_i32_2 : i32, i32, i32, i32, i32
  }
  func.func @transform_1(%arg0: i32) -> (i32, i32, i32) {
    %c0_i32 = arith.constant 0 : i32
    %c0_i32_0 = arith.constant 0 : i32
    %c0_i32_1 = arith.constant 0 : i32
    %c0_i32_2 = arith.constant 0 : i32
    return %c0_i32, %c0_i32_0, %c0_i32_1 : i32, i32, i32
  }
  func.func @transform_2(%arg0: i32) -> (i32, i32, i32, i32) {
    %c0_i32 = arith.constant 0 : i32
    %c0_i32_0 = arith.constant 0 : i32
    %c0_i32_1 = arith.constant 0 : i32
    %c0_i32_2 = arith.constant 0 : i32
    return %arg0, %c0_i32, %c0_i32_0, %c0_i32_1 : i32, i32, i32, i32
  }
  func.func @transform_3(%arg0: i32) -> (i32, i32, i32) {
    %c0_i32 = arith.constant 0 : i32
    %c0_i32_0 = arith.constant 0 : i32
    %c0_i32_1 = arith.constant 0 : i32
    return %arg0, %c0_i32, %c0_i32_0 : i32, i32, i32
  }
}

module attributes {stable_mosaic.version = 11 : i64} {
  func.func @_bn_apply_kernel(%arg0: i32, %arg1: memref<1x16x16x4xf32, #tpu.memory_space<vmem>>, %arg2: memref<2x4xf32, #tpu.memory_space<vmem>>, %arg3: memref<1x16x16x4xf32, #tpu.memory_space<vmem>>) attributes {dimension_semantics = [#tpu.dimension_semantics<parallel>], iteration_bounds = array<i64: 2>, scalar_prefetch = 0 : i64, scratch_operands = 0 : i64, tpu.core_type = #tpu.core_type<tc>, window_params = [{transform_indices = @transform_0, window_bounds = array<i64: 1, 16, 16, 4>}, {pipeline_mode = #tpu.pipeline_mode<synchronous>, transform_indices = @transform_1, window_bounds = array<i64: 2, 4>}, {transform_indices = @transform_2, window_bounds = array<i64: 1, 16, 16, 4>}]} {
    %c0 = arith.constant 0 : index
    %c0_0 = arith.constant 0 : index
    %0 = vector.load %arg2[%c0, %c0_0] : memref<2x4xf32, #tpu.memory_space<vmem>>, vector<1x4xf32>
    %1 = vector.shape_cast %0 : vector<1x4xf32> to vector<1x1x1x4xf32>
    %c1 = arith.constant 1 : index
    %c0_1 = arith.constant 0 : index
    %2 = vector.load %arg2[%c1, %c0_1] : memref<2x4xf32, #tpu.memory_space<vmem>>, vector<1x4xf32>
    %3 = vector.shape_cast %2 : vector<1x4xf32> to vector<1x1x1x4xf32>
    %c0_2 = arith.constant 0 : index
    %c0_3 = arith.constant 0 : index
    %c0_4 = arith.constant 0 : index
    %c0_5 = arith.constant 0 : index
    %4 = vector.load %arg1[%c0_2, %c0_3, %c0_4, %c0_5] : memref<1x16x16x4xf32, #tpu.memory_space<vmem>>, vector<1x16x16x4xf32>
    %5 = vector.broadcast %1 : vector<1x1x1x4xf32> to vector<1x16x16x4xf32>
    %6 = arith.mulf %4, %5 : vector<1x16x16x4xf32>
    %7 = vector.broadcast %3 : vector<1x1x1x4xf32> to vector<1x16x16x4xf32>
    %8 = arith.addf %6, %7 : vector<1x16x16x4xf32>
    %c0_6 = arith.constant 0 : index
    %c0_7 = arith.constant 0 : index
    %c0_8 = arith.constant 0 : index
    %c0_9 = arith.constant 0 : index
    %9 = vector.load %arg3[%c0_6, %c0_7, %c0_8, %c0_9] : memref<1x16x16x4xf32, #tpu.memory_space<vmem>>, vector<1x16x16x4xf32>
    tpu.vector_store %arg3[%c0_6, %c0_7, %c0_8, %c0_9], %8 {strides = array<i32>} : memref<1x16x16x4xf32, #tpu.memory_space<vmem>>, vector<1x16x16x4xf32>,
    return
  }
  func.func @transform_0(%arg0: i32) -> (i32, i32, i32, i32) {
    %c0_i32 = arith.constant 0 : i32
    %c0_i32_0 = arith.constant 0 : i32
    %c0_i32_1 = arith.constant 0 : i32
    %c0_i32_2 = arith.constant 0 : i32
    return %arg0, %c0_i32, %c0_i32_0, %c0_i32_1 : i32, i32, i32, i32
  }
  func.func @transform_1(%arg0: i32) -> (i32, i32) {
    %c0_i32 = arith.constant 0 : i32
    %c0_i32_0 = arith.constant 0 : i32
    %c0_i32_1 = arith.constant 0 : i32
    return %c0_i32, %c0_i32_0 : i32, i32
  }
  func.func @transform_2(%arg0: i32) -> (i32, i32, i32, i32) {
    %c0_i32 = arith.constant 0 : i32
    %c0_i32_0 = arith.constant 0 : i32
    %c0_i32_1 = arith.constant 0 : i32
    %c0_i32_2 = arith.constant 0 : i32
    return %arg0, %c0_i32, %c0_i32_0, %c0_i32_1 : i32, i32, i32, i32
  }
}

</mosaic_0001>

<llo_original>
// kernel: pool_bn_forward.3
$region0: #{pool_bn_forward.3}
  #allocation0 [shape = 'u32[]', space=smem, size = 0x4, offset = 0x4, fixed_abs, tag = 'smem constant byte address 0x4 - core index']
  #allocation1 [shape = 'u32[144,128]{1,0:T(1,128)}', space=vmem, size = 0x12000, scoped, tag = 'internal scratch']
  %s0 = inlined_call_operand.vmem [shape: f32[2,16,16,4], index: 0, kind: input, shape index: {}, may-alias: {0,2}]
  %s1 = inlined_call_operand.vmem [shape: f32[2,4], index: 1, kind: input, shape index: {}]
  %s2 = inlined_call_operand.vmem [shape: f32[2,16,16,4], index: 2, kind: output, shape index: {}, may-alias: {0,2}]
  %s3 = sld [smem:[#allocation0]]
  $region41: #{pool_bn_forward.3} parent=0
    _
  %s5 = ssub.s32 1, %s3
  %s6 = scalar_select 0, %s5, %s3
  loop: start=0, step=1, limit=4
  $region2: #{pool_bn_forward.3} parent=0 // loop_pre_header
    _
  $region3: #{pool_bn_forward.3} parent=0 // loop_header
    %s8 = sphi 0, %s12
    %p9 = scmp.ge.s32.totalorder %s8, 4
    %s18 = sphi 0, %s20
    %s21 = sphi 0, %s18
    %s22 = sphi 0, %s21
    %s38 = sphi 0, %s22
    %s42 = sphi 0, %s42
    %s44 = sphi 0, %s42
    %s45 = sphi 0, %s44
    %s59 = sphi 0, %s45
    %s65 = sphi 0, %s67
    %s68 = sphi 0, %s65
    %s69 = sphi 0, %s68
    %s85 = sphi 0, %s69
  $region4: #{pool_bn_forward.3} parent=0 // loop_header_branch
    %11 = sbr.rel (%p9) target = $region8
  $region5: #{pool_bn_forward.3} parent=0 // loop_body
    %s13 = ssub.s32 %s8, 1
    %s14 = ssub.s32 %s8, 2
    %s15 = sadd.s32 %s8, 1
    %s16 = ssub.s32 %s8, %s15
    %p17 = scmp.eq.s32.totalorder %s16, 0
    %s19 = sadd.s32 %s18, 1
    %s20 = scalar_select %p17, %s18, %s19
    %p23 = pneg %p17
    %p24 = scmp.eq.s32.totalorder %s8, 1
    %p25 = por %p23, %p24
    %p26 = scmp.ne.s32.totalorder %s18, %s21
    %p27 = scmp.eq.s32.totalorder %s8, 0
    %p28 = por %p26, %p27
    %p29 = scmp.ne.s32.totalorder %s18, %s21
    %p30 = scmp.eq.s32.totalorder %s13, 1
    %p31 = por %p29, %p30
    %p32 = scmp.ne.s32.totalorder %s21, %s22
    %p33 = scmp.eq.s32.totalorder %s13, 0
    %p34 = por %p32, %p33
    %p35 = scmp.ne.s32.totalorder %s21, %s22
    %p36 = scmp.eq.s32.totalorder %s14, 1
    %p37 = por %p35, %p36
    %p39 = scmp.ne.s32.totalorder %s22, %s38
    %p40 = scmp.eq.s32.totalorder %s14, 0
    %p41 = por %p39, %p40
    %s43 = sadd.s32 %s42, 1
    %p46 = scmp.eq.s32.totalorder %s8, 1
    %p47 = scmp.ne.s32.totalorder %s42, %s44
    %p48 = scmp.eq.s32.totalorder %s8, 0
    %p49 = por %p47, %p48
    %p50 = scmp.ne.s32.totalorder %s42, %s44
    %p51 = scmp.eq.s32.totalorder %s13, 1
    %p52 = por %p50, %p51
    %p53 = scmp.ne.s32.totalorder %s44, %s45
    %p54 = scmp.eq.s32.totalorder %s13, 0
    %p55 = por %p53, %p54
    %p56 = scmp.ne.s32.totalorder %s44, %s45
    %p57 = scmp.eq.s32.totalorder %s14, 1
    %p58 = por %p56, %p57
    %p60 = scmp.ne.s32.totalorder %s45, %s59
    %p61 = scmp.eq.s32.totalorder %s14, 0
    %p62 = por %p60, %p61
    %s63 = ssub.s32 %s8, %s15
    %p64 = scmp.eq.s32.totalorder %s63, 0
    %s66 = sadd.s32 %s65, 1
    %s67 = scalar_select %p64, %s65, %s66
    %p70 = pneg %p64
    %p71 = scmp.eq.s32.totalorder %s8, 1
    %p72 = por %p70, %p71
    %p73 = scmp.ne.s32.totalorder %s65, %s68
    %p74 = scmp.eq.s32.totalorder %s8, 0
    %p75 = por %p73, %p74
    %p76 = scmp.ne.s32.totalorder %s65, %s68
    %p77 = scmp.eq.s32.totalorder %s13, 1
    %p78 = por %p76, %p77
    %p79 = scmp.ne.s32.totalorder %s68, %s69
    %p80 = scmp.eq.s32.totalorder %s13, 0
    %p81 = por %p79, %p80
    %p82 = scmp.ne.s32.totalorder %s68, %s69
    %p83 = scmp.eq.s32.totalorder %s14, 1
    %p84 = por %p82, %p83
    %p86 = scmp.ne.s32.totalorder %s69, %s85
    %p87 = scmp.eq.s32.totalorder %s14, 0
    %p88 = por %p86, %p87
    %p89 = scmp.le.s32.totalorder 1, %s8
    %p90 = scmp.lt.s32.totalorder %s8, 3
    %p91 = pnand %p89, %p90
    %p92 = pneg %p91
    // Predicated region
    $region9: #{pool_bn_forward.3} parent=5 // pred_check
      _
    $region10: #{pool_bn_forward.3} parent=5 // pred_check_branch
      %94 = sbr.rel (%p91) target = $region12
    $region11: #{pool_bn_forward.3} parent=5 // pred_region
      %s95 = ssub.s32 %s8, 1
      // Predicated region
      $region13: #{pool_bn_forward.3} parent=11 // pred_check
        %p96 = pneg %p55
      $region14: #{pool_bn_forward.3} parent=11 // pred_check_branch
        %98 = sbr.rel (%p96) target = $region16
      $region15: #{pool_bn_forward.3} parent=11 // pred_region
        _
      $region16: #{pool_bn_forward.3} parent=11 // pred_fallthru
        _
    $region12: #{pool_bn_forward.3} parent=5 // pred_fallthru
      _
    %p99 = scmp.lt.s32.totalorder %s8, 2
    // Predicated region
    $region17: #{pool_bn_forward.3} parent=5 // pred_check
      %p100 = pneg %p99
    $region18: #{pool_bn_forward.3} parent=5 // pred_check_branch
      %102 = sbr.rel (%p100) target = $region20
    $region19: #{pool_bn_forward.3} parent=5 // pred_region
      // Predicated region
      $region21: #{pool_bn_forward.3} parent=19 // pred_check
        %p103 = pneg %p28
      $region22: #{pool_bn_forward.3} parent=19 // pred_check_branch
        %105 = sbr.rel (%p103) target = $region24
      $region23: #{pool_bn_forward.3} parent=19 // pred_region
        %p106 = scmp.lt.s32.totalorder %s8, 1
        %s107 = scalar_select %p106, %s8, 1
        %s108 = smul.addr %s107, 32
        %s109 = smul.addr %s108, 8
        %s110 = scalar_lea.vmem %s0, %s109
      $region24: #{pool_bn_forward.3} parent=19 // pred_fallthru
        _
    $region20: #{pool_bn_forward.3} parent=5 // pred_fallthru
      _
    %p111 = scmp.le.s32.totalorder 1, %s8
    %p112 = scmp.lt.s32.totalorder %s8, 3
    %p113 = pnand %p111, %p112
    %p114 = pneg %p113
    // Predicated region
    $region25: #{pool_bn_forward.3} parent=5 // pred_check
      _
    $region26: #{pool_bn_forward.3} parent=5 // pred_check_branch
      %116 = sbr.rel (%p113) target = $region28
    $region27: #{pool_bn_forward.3} parent=5 // pred_region
      %s117 = ssub.s32 %s8, 1
      %p118 = scmp.lt.s32.totalorder %s13, 1
      %s119 = scalar_select %p118, %s13, 1
      %s120 = smul.addr %s119, 32
      %s121 = smul.addr %s120, 8
      %s122 = scalar_lea.vmem %s0, %s121
      %p123 = pneg %p34
      %p124 = pneg %p31
      %p125 = pneg %p55
      %p126 = pneg %p52
      %p127 = pneg %p81
      %p128 = pneg %p78
      %p129 = scmp.lt.s32.totalorder %s13, 1
      %s130 = scalar_select %p129, %s13, 1
      %s131 = smul.addr %s130, 32
      %s132 = smul.addr %s131, 8
      %s133 = scalar_lea.vmem %s2, %s132
      %p134 = scmp.lt.s32.totalorder %s13, 1
      %s135 = scalar_select %p134, %s13, 1
      %s136 = smul.addr %s135, 32
      %s137 = smul.addr %s136, 8
      %s138 = scalar_lea.vmem %s0, %s137
      %p139 = scmp.lt.s32.totalorder %s13, 1
      %s140 = scalar_select %p139, %s13, 1
      %s141 = smul.addr %s140, 32
      %s142 = smul.addr %s141, 8
      %s143 = scalar_lea.vmem %s2, %s142
      %v144 = vld [vmem:[%s1] sm:$0x1]
      %v145 = vld [vmem:[%s1 + $0x1] sm:$0x1]
      %v146 = vld [vmem:[%s138] sm:$0xff]
      %v147 = vld [vmem:[%s138 + $0x8] sm:$0xff]
      %v148 = vld [vmem:[%s138 + $0x10] sm:$0xff]
      %v149 = vld [vmem:[%s138 + $0x18] sm:$0xff]
      %v150 = vld [vmem:[%s138 + $0x20] sm:$0xff]
      %v151 = vld [vmem:[%s138 + $0x28] sm:$0xff]
      %v152 = vld [vmem:[%s138 + $0x30] sm:$0xff]
      %v153 = vld [vmem:[%s138 + $0x38] sm:$0xff]
      %v154 = vld [vmem:[%s138 + $0x40] sm:$0xff]
      %v155 = vld [vmem:[%s138 + $0x48] sm:$0xff]
      %v156 = vld [vmem:[%s138 + $0x50] sm:$0xff]
      %v157 = vld [vmem:[%s138 + $0x58] sm:$0xff]
      %v158 = vld [vmem:[%s138 + $0x60] sm:$0xff]
      %v159 = vld [vmem:[%s138 + $0x68] sm:$0xff]
      %v160 = vld [vmem:[%s138 + $0x70] sm:$0xff]
      %v161 = vld [vmem:[%s138 + $0x78] sm:$0xff]
      %v162 = vld [vmem:[%s138 + $0x80] sm:$0xff]
      %v163 = vld [vmem:[%s138 + $0x88] sm:$0xff]
      %v164 = vld [vmem:[%s138 + $0x90] sm:$0xff]
      %v165 = vld [vmem:[%s138 + $0x98] sm:$0xff]
      %v166 = vld [vmem:[%s138 + $0xa0] sm:$0xff]
      %v167 = vld [vmem:[%s138 + $0xa8] sm:$0xff]
      %v168 = vld [vmem:[%s138 + $0xb0] sm:$0xff]
      %v169 = vld [vmem:[%s138 + $0xb8] sm:$0xff]
      %v170 = vld [vmem:[%s138 + $0xc0] sm:$0xff]
      %v171 = vld [vmem:[%s138 + $0xc8] sm:$0xff]
      %v172 = vld [vmem:[%s138 + $0xd0] sm:$0xff]
      %v173 = vld [vmem:[%s138 + $0xd8] sm:$0xff]
      %v174 = vld [vmem:[%s138 + $0xe0] sm:$0xff]
      %v175 = vld [vmem:[%s138 + $0xe8] sm:$0xff]
      %v176 = vld [vmem:[%s138 + $0xf0] sm:$0xff]
      %v177 = vld [vmem:[%s138 + $0xf8] sm:$0xff]
      %v178 = vlaneseq
      %v179 = vshrl.u32 %v178, 7
      %v180 = vsub.s32 0, %v179
      %v181 = vrot.slane %v144, %v180
      %v182 = vmul.f32 %v146, %v181
      %v183 = vmul.f32 %v147, %v181
      %v184 = vmul.f32 %v148, %v181
      %v185 = vmul.f32 %v149, %v181
      %v186 = vmul.f32 %v150, %v181
      %v187 = vmul.f32 %v151, %v181
      %v188 = vmul.f32 %v152, %v181
      %v189 = vmul.f32 %v153, %v181
      %v190 = vmul.f32 %v154, %v181
      %v191 = vmul.f32 %v155, %v181
      %v192 = vmul.f32 %v156, %v181
      %v193 = vmul.f32 %v157, %v181
      %v194 = vmul.f32 %v158, %v181
      %v195 = vmul.f32 %v159, %v181
      %v196 = vmul.f32 %v160, %v181
      %v197 = vmul.f32 %v161, %v181
      %v198 = vmul.f32 %v162, %v181
      %v199 = vmul.f32 %v163, %v181
      %v200 = vmul.f32 %v164, %v181
      %v201 = vmul.f32 %v165, %v181
      %v202 = vmul.f32 %v166, %v181
      %v203 = vmul.f32 %v167, %v181
      %v204 = vmul.f32 %v168, %v181
      %v205 = vmul.f32 %v169, %v181
      %v206 = vmul.f32 %v170, %v181
      %v207 = vmul.f32 %v171, %v181
      %v208 = vmul.f32 %v172, %v181
      %v209 = vmul.f32 %v173, %v181
      %v210 = vmul.f32 %v174, %v181
      %v211 = vmul.f32 %v175, %v181
      %v212 = vmul.f32 %v176, %v181
      %v213 = vmul.f32 %v177, %v181
      %v214 = vlaneseq
      %v215 = vshrl.u32 %v214, 7
      %v216 = vsub.s32 0, %v215
      %v217 = vrot.slane %v145, %v216
      %v218 = vadd.f32 %v182, %v217
      %v219 = vadd.f32 %v183, %v217
      %v220 = vadd.f32 %v184, %v217
      %v221 = vadd.f32 %v185, %v217
      %v222 = vadd.f32 %v186, %v217
      %v223 = vadd.f32 %v187, %v217
      %v224 = vadd.f32 %v188, %v217
      %v225 = vadd.f32 %v189, %v217
      %v226 = vadd.f32 %v190, %v217
      %v227 = vadd.f32 %v191, %v217
      %v228 = vadd.f32 %v192, %v217
      %v229 = vadd.f32 %v193, %v217
      %v230 = vadd.f32 %v194, %v217
      %v231 = vadd.f32 %v195, %v217
      %v232 = vadd.f32 %v196, %v217
      %v233 = vadd.f32 %v197, %v217
      %v234 = vadd.f32 %v198, %v217
      %v235 = vadd.f32 %v199, %v217
      %v236 = vadd.f32 %v200, %v217
      %v237 = vadd.f32 %v201, %v217
      %v238 = vadd.f32 %v202, %v217
      %v239 = vadd.f32 %v203, %v217
      %v240 = vadd.f32 %v204, %v217
      %v241 = vadd.f32 %v205, %v217
      %v242 = vadd.f32 %v206, %v217
      %v243 = vadd.f32 %v207, %v217
      %v244 = vadd.f32 %v208, %v217
      %v245 = vadd.f32 %v209, %v217
      %v246 = vadd.f32 %v210, %v217
      %v247 = vadd.f32 %v211, %v217
      %v248 = vadd.f32 %v212, %v217
      %v249 = vadd.f32 %v213, %v217
      %vm250 = vcmask 31744
      %251 = vst.msk [vmem:[%s143] sm:$0xff] %vm250, %v218
      %252 = vst.msk [vmem:[%s143 + $0x8] sm:$0xff] %vm250, %v219
      %253 = vst.msk [vmem:[%s143 + $0x10] sm:$0xff] %vm250, %v220
      %254 = vst.msk [vmem:[%s143 + $0x18] sm:$0xff] %vm250, %v221
      %255 = vst.msk [vmem:[%s143 + $0x20] sm:$0xff] %vm250, %v222
      %256 = vst.msk [vmem:[%s143 + $0x28] sm:$0xff] %vm250, %v223
      %257 = vst.msk [vmem:[%s143 + $0x30] sm:$0xff] %vm250, %v224
      %258 = vst.msk [vmem:[%s143 + $0x38] sm:$0xff] %vm250, %v225
      %259 = vst.msk [vmem:[%s143 + $0x40] sm:$0xff] %vm250, %v226
      %260 = vst.msk [vmem:[%s143 + $0x48] sm:$0xff] %vm250, %v227
      %261 = vst.msk [vmem:[%s143 + $0x50] sm:$0xff] %vm250, %v228
      %262 = vst.msk [vmem:[%s143 + $0x58] sm:$0xff] %vm250, %v229
      %263 = vst.msk [vmem:[%s143 + $0x60] sm:$0xff] %vm250, %v230
      %264 = vst.msk [vmem:[%s143 + $0x68] sm:$0xff] %vm250, %v231
      %265 = vst.msk [vmem:[%s143 + $0x70] sm:$0xff] %vm250, %v232
      %266 = vst.msk [vmem:[%s143 + $0x78] sm:$0xff] %vm250, %v233
      %267 = vst.msk [vmem:[%s143 + $0x80] sm:$0xff] %vm250, %v234
      %268 = vst.msk [vmem:[%s143 + $0x88] sm:$0xff] %vm250, %v235
      %269 = vst.msk [vmem:[%s143 + $0x90] sm:$0xff] %vm250, %v236
      %270 = vst.msk [vmem:[%s143 + $0x98] sm:$0xff] %vm250, %v237
      %271 = vst.msk [vmem:[%s143 + $0xa0] sm:$0xff] %vm250, %v238
      %272 = vst.msk [vmem:[%s143 + $0xa8] sm:$0xff] %vm250, %v239
      %273 = vst.msk [vmem:[%s143 + $0xb0] sm:$0xff] %vm250, %v240
      %274 = vst.msk [vmem:[%s143 + $0xb8] sm:$0xff] %vm250, %v241
      %275 = vst.msk [vmem:[%s143 + $0xc0] sm:$0xff] %vm250, %v242
      %276 = vst.msk [vmem:[%s143 + $0xc8] sm:$0xff] %vm250, %v243
      %277 = vst.msk [vmem:[%s143 + $0xd0] sm:$0xff] %vm250, %v244
      %278 = vst.msk [vmem:[%s143 + $0xd8] sm:$0xff] %vm250, %v245
      %279 = vst.msk [vmem:[%s143 + $0xe0] sm:$0xff] %vm250, %v246
      %280 = vst.msk [vmem:[%s143 + $0xe8] sm:$0xff] %vm250, %v247
      %281 = vst.msk [vmem:[%s143 + $0xf0] sm:$0xff] %vm250, %v248
      %282 = vst.msk [vmem:[%s143 + $0xf8] sm:$0xff] %vm250, %v249
      %p283 = scmp.lt.s32.totalorder %s13, 1
      %s284 = scalar_select %p283, %s13, 1
      %s285 = smul.addr %s284, 32
      %s286 = smul.addr %s285, 8
      %s287 = scalar_lea.vmem %s2, %s286
      // Predicated region
      $region29: #{pool_bn_forward.3} parent=27 // pred_check
        %p288 = pneg %p78
      $region30: #{pool_bn_forward.3} parent=27 // pred_check_branch
        %290 = sbr.rel (%p288) target = $region32
      $region31: #{pool_bn_forward.3} parent=27 // pred_region
        _
      $region32: #{pool_bn_forward.3} parent=27 // pred_fallthru
        _
    $region28: #{pool_bn_forward.3} parent=5 // pred_fallthru
      _
    %p291 = scmp.le.s32.totalorder 2, %s8
    // Predicated region
    $region33: #{pool_bn_forward.3} parent=5 // pred_check
      %p292 = pneg %p291
    $region34: #{pool_bn_forward.3} parent=5 // pred_check_branch
      %294 = sbr.rel (%p292) target = $region36
    $region35: #{pool_bn_forward.3} parent=5 // pred_region
      %s295 = ssub.s32 %s8, 2
      // Predicated region
      $region37: #{pool_bn_forward.3} parent=35 // pred_check
        %p296 = pneg %p84
      $region38: #{pool_bn_forward.3} parent=35 // pred_check_branch
        %298 = sbr.rel (%p296) target = $region40
      $region39: #{pool_bn_forward.3} parent=35 // pred_region
        %p299 = scmp.lt.s32.totalorder %s14, 1
        %s300 = scalar_select %p299, %s14, 1
        %s301 = smul.addr %s300, 32
        %s302 = smul.addr %s301, 8
        %s303 = scalar_lea.vmem %s2, %s302
      $region40: #{pool_bn_forward.3} parent=35 // pred_fallthru
        _
    $region36: #{pool_bn_forward.3} parent=5 // pred_fallthru
      _
  $region6: #{pool_bn_forward.3} parent=0 // loop_footer
    %s12 = sadd.s32 1, %s8
  $region7: #{pool_bn_forward.3} parent=0 // loop_footer_branch
    %7 = sbr.rel target = $region3
  $region8: #{pool_bn_forward.3} parent=0 // loop_exit
    _

// kernel: pool_bn_forward.2
$region0: #{pool_bn_forward.2}
  #allocation0 [shape = 'u32[]', space=smem, size = 0x4, offset = 0x4, fixed_abs, tag = 'smem constant byte address 0x4 - core index']
  #allocation1 [shape = 'u32[144,128]{1,0:T(1,128)}', space=vmem, size = 0x12000, scoped, tag = 'internal scratch']
  %s0 = inlined_call_operand.vmem [shape: f32[1,2,18,18,4], index: 0, kind: input, shape index: {}]
  %s1 = inlined_call_operand.vmem [shape: f32[16,16,1], index: 1, kind: input, shape index: {}]
  %s2 = inlined_call_operand.vmem [shape: f32[2,16,16,4], index: 2, kind: output, shape index: {0}]
  %s3 = inlined_call_operand.vmem [shape: f32[2,2,4], index: 3, kind: output, shape index: {1}]
  %4 = xla_tuple %s2, %s3
  %s5 = sld [smem:[#allocation0]]
  $region49: #{pool_bn_forward.2} parent=0
    _
  %s7 = ssub.s32 1, %s5
  %s8 = scalar_select 0, %s7, %s5
  loop: start=0, step=1, limit=4
  $region2: #{pool_bn_forward.2} parent=0 // loop_pre_header
    _
  $region3: #{pool_bn_forward.2} parent=0 // loop_header
    %s10 = sphi 0, %s14
    %p11 = scmp.ge.s32.totalorder %s10, 4
    %s20 = sphi 0, %s22
    %s23 = sphi 0, %s20
    %s24 = sphi 0, %s23
    %s40 = sphi 0, %s24
    %s44 = sphi 0, %s44
    %s46 = sphi 0, %s44
    %s47 = sphi 0, %s46
    %s61 = sphi 0, %s47
    %s67 = sphi 0, %s69
    %s70 = sphi 0, %s67
    %s71 = sphi 0, %s70
    %s87 = sphi 0, %s71
    %s93 = sphi 0, %s95
    %s96 = sphi 0, %s93
    %s97 = sphi 0, %s96
    %s113 = sphi 0, %s97
  $region4: #{pool_bn_forward.2} parent=0 // loop_header_branch
    %13 = sbr.rel (%p11) target = $region8
  $region5: #{pool_bn_forward.2} parent=0 // loop_body
    %s15 = ssub.s32 %s10, 1
    %s16 = ssub.s32 %s10, 2
    %s17 = sadd.s32 %s10, 1
    %s18 = ssub.s32 %s10, %s17
    %p19 = scmp.eq.s32.totalorder %s18, 0
    %s21 = sadd.s32 %s20, 1
    %s22 = scalar_select %p19, %s20, %s21
    %p25 = pneg %p19
    %p26 = scmp.eq.s32.totalorder %s10, 1
    %p27 = por %p25, %p26
    %p28 = scmp.ne.s32.totalorder %s20, %s23
    %p29 = scmp.eq.s32.totalorder %s10, 0
    %p30 = por %p28, %p29
    %p31 = scmp.ne.s32.totalorder %s20, %s23
    %p32 = scmp.eq.s32.totalorder %s15, 1
    %p33 = por %p31, %p32
    %p34 = scmp.ne.s32.totalorder %s23, %s24
    %p35 = scmp.eq.s32.totalorder %s15, 0
    %p36 = por %p34, %p35
    %p37 = scmp.ne.s32.totalorder %s23, %s24
    %p38 = scmp.eq.s32.totalorder %s16, 1
    %p39 = por %p37, %p38
    %p41 = scmp.ne.s32.totalorder %s24, %s40
    %p42 = scmp.eq.s32.totalorder %s16, 0
    %p43 = por %p41, %p42
    %s45 = sadd.s32 %s44, 1
    %p48 = scmp.eq.s32.totalorder %s10, 1
    %p49 = scmp.ne.s32.totalorder %s44, %s46
    %p50 = scmp.eq.s32.totalorder %s10, 0
    %p51 = por %p49, %p50
    %p52 = scmp.ne.s32.totalorder %s44, %s46
    %p53 = scmp.eq.s32.totalorder %s15, 1
    %p54 = por %p52, %p53
    %p55 = scmp.ne.s32.totalorder %s46, %s47
    %p56 = scmp.eq.s32.totalorder %s15, 0
    %p57 = por %p55, %p56
    %p58 = scmp.ne.s32.totalorder %s46, %s47
    %p59 = scmp.eq.s32.totalorder %s16, 1
    %p60 = por %p58, %p59
    %p62 = scmp.ne.s32.totalorder %s47, %s61
    %p63 = scmp.eq.s32.totalorder %s16, 0
    %p64 = por %p62, %p63
    %s65 = ssub.s32 %s10, %s17
    %p66 = scmp.eq.s32.totalorder %s65, 0
    %s68 = sadd.s32 %s67, 1
    %s69 = scalar_select %p66, %s67, %s68
    %p72 = pneg %p66
    %p73 = scmp.eq.s32.totalorder %s10, 1
    %p74 = por %p72, %p73
    %p75 = scmp.ne.s32.totalorder %s67, %s70
    %p76 = scmp.eq.s32.totalorder %s10, 0
    %p77 = por %p75, %p76
    %p78 = scmp.ne.s32.totalorder %s67, %s70
    %p79 = scmp.eq.s32.totalorder %s15, 1
    %p80 = por %p78, %p79
    %p81 = scmp.ne.s32.totalorder %s70, %s71
    %p82 = scmp.eq.s32.totalorder %s15, 0
    %p83 = por %p81, %p82
    %p84 = scmp.ne.s32.totalorder %s70, %s71
    %p85 = scmp.eq.s32.totalorder %s16, 1
    %p86 = por %p84, %p85
    %p88 = scmp.ne.s32.totalorder %s71, %s87
    %p89 = scmp.eq.s32.totalorder %s16, 0
    %p90 = por %p88, %p89
    %s91 = ssub.s32 %s10, %s17
    %p92 = scmp.eq.s32.totalorder %s91, 0
    %s94 = sadd.s32 %s93, 1
    %s95 = scalar_select %p92, %s93, %s94
    %p98 = pneg %p92
    %p99 = scmp.eq.s32.totalorder %s10, 1
    %p100 = por %p98, %p99
    %p101 = scmp.ne.s32.totalorder %s93, %s96
    %p102 = scmp.eq.s32.totalorder %s10, 0
    %p103 = por %p101, %p102
    %p104 = scmp.ne.s32.totalorder %s93, %s96
    %p105 = scmp.eq.s32.totalorder %s15, 1
    %p106 = por %p104, %p105
    %p107 = scmp.ne.s32.totalorder %s96, %s97
    %p108 = scmp.eq.s32.totalorder %s15, 0
    %p109 = por %p107, %p108
    %p110 = scmp.ne.s32.totalorder %s96, %s97
    %p111 = scmp.eq.s32.totalorder %s16, 1
    %p112 = por %p110, %p111
    %p114 = scmp.ne.s32.totalorder %s97, %s113
    %p115 = scmp.eq.s32.totalorder %s16, 0
    %p116 = por %p114, %p115
    %p117 = scmp.le.s32.totalorder 1, %s10
    %p118 = scmp.lt.s32.totalorder %s10, 3
    %p119 = pnand %p117, %p118
    %p120 = pneg %p119
    // Predicated region
    $region9: #{pool_bn_forward.2} parent=5 // pred_check
      _
    $region10: #{pool_bn_forward.2} parent=5 // pred_check_branch
      %122 = sbr.rel (%p119) target = $region12
    $region11: #{pool_bn_forward.2} parent=5 // pred_region
      %s123 = ssub.s32 %s10, 1
      // Predicated region
      $region13: #{pool_bn_forward.2} parent=11 // pred_check
        %p124 = pneg %p57
      $region14: #{pool_bn_forward.2} parent=11 // pred_check_branch
        %126 = sbr.rel (%p124) target = $region16
      $region15: #{pool_bn_forward.2} parent=11 // pred_region
        _
      $region16: #{pool_bn_forward.2} parent=11 // pred_fallthru
        _
    $region12: #{pool_bn_forward.2} parent=5 // pred_fallthru
      _
    %p127 = scmp.lt.s32.totalorder %s10, 2
    // Predicated region
    $region17: #{pool_bn_forward.2} parent=5 // pred_check
      %p128 = pneg %p127
    $region18: #{pool_bn_forward.2} parent=5 // pred_check_branch
      %130 = sbr.rel (%p128) target = $region20
    $region19: #{pool_bn_forward.2} parent=5 // pred_region
      // Predicated region
      $region21: #{pool_bn_forward.2} parent=19 // pred_check
        %p131 = pneg %p30
      $region22: #{pool_bn_forward.2} parent=19 // pred_check_branch
        %133 = sbr.rel (%p131) target = $region24
      $region23: #{pool_bn_forward.2} parent=19 // pred_region
        %p134 = scmp.lt.s32.totalorder %s10, 1
        %s135 = scalar_select %p134, %s10, 1
        %s136 = smul.addr %s135, 54
        %s137 = smul.addr %s136, 8
        %s138 = scalar_lea.vmem %s0, %s137
      $region24: #{pool_bn_forward.2} parent=19 // pred_fallthru
        _
    $region20: #{pool_bn_forward.2} parent=5 // pred_fallthru
      _
    %p139 = scmp.le.s32.totalorder 1, %s10
    %p140 = scmp.lt.s32.totalorder %s10, 3
    %p141 = pnand %p139, %p140
    %p142 = pneg %p141
    // Predicated region
    $region25: #{pool_bn_forward.2} parent=5 // pred_check
      _
    $region26: #{pool_bn_forward.2} parent=5 // pred_check_branch
      %144 = sbr.rel (%p141) target = $region28
    $region27: #{pool_bn_forward.2} parent=5 // pred_region
      %s145 = ssub.s32 %s10, 1
      %p146 = scmp.lt.s32.totalorder %s15, 1
      %s147 = scalar_select %p146, %s15, 1
      %s148 = smul.addr %s147, 54
      %s149 = smul.addr %s148, 8
      %s150 = scalar_lea.vmem %s0, %s149
      %p151 = pneg %p36
      %p152 = pneg %p33
      %p153 = pneg %p57
      %p154 = pneg %p54
      %p155 = pneg %p83
      %p156 = pneg %p80
      %p157 = scmp.lt.s32.totalorder %s15, 1
      %s158 = scalar_select %p157, %s15, 1
      %s159 = smul.addr %s158, 32
      %s160 = smul.addr %s159, 8
      %s161 = scalar_lea.vmem %s2, %s160
      %p162 = pneg %p109
      %p163 = pneg %p106
      %p164 = scmp.lt.s32.totalorder %s15, 1
      %s165 = scalar_select %p164, %s15, 1
      %s166 = smul.addr %s165, 2
      %s167 = scalar_lea.vmem %s3, %s166
      %p168 = scmp.lt.s32.totalorder %s15, 1
      %s169 = scalar_select %p168, %s15, 1
      %s170 = smul.addr %s169, 54
      %s171 = smul.addr %s170, 8
      %s172 = scalar_lea.vmem %s0, %s171
      %p173 = scmp.lt.s32.totalorder %s15, 1
      %s174 = scalar_select %p173, %s15, 1
      %s175 = smul.addr %s174, 32
      %s176 = smul.addr %s175, 8
      %s177 = scalar_lea.vmem %s2, %s176
      %p178 = scmp.lt.s32.totalorder %s15, 1
      %s179 = scalar_select %p178, %s15, 1
      %s180 = smul.addr %s179, 2
      %s181 = scalar_lea.vmem %s3, %s180
      %v182 = vld [vmem:[%s172] sm:$0xff]
      %v183 = vld [vmem:[%s172 + $0x8] sm:$0xff]
      %v184 = vld [vmem:[%s172 + $0x18] sm:$0xff]
      %v185 = vld [vmem:[%s172 + $0x20] sm:$0xff]
      %v186 = vld [vmem:[%s172 + $0x30] sm:$0xff]
      %v187 = vld [vmem:[%s172 + $0x38] sm:$0xff]
      %v188 = vld [vmem:[%s172 + $0x48] sm:$0xff]
      %v189 = vld [vmem:[%s172 + $0x50] sm:$0xff]
      %v190 = vld [vmem:[%s172 + $0x60] sm:$0xff]
      %v191 = vld [vmem:[%s172 + $0x68] sm:$0xff]
      %v192 = vld [vmem:[%s172 + $0x78] sm:$0xff]
      %v193 = vld [vmem:[%s172 + $0x80] sm:$0xff]
      %v194 = vld [vmem:[%s172 + $0x90] sm:$0xff]
      %v195 = vld [vmem:[%s172 + $0x98] sm:$0xff]
      %v196 = vld [vmem:[%s172 + $0xa8] sm:$0xff]
      %v197 = vld [vmem:[%s172 + $0xb0] sm:$0xff]
      %v198 = vld [vmem:[%s172 + $0xc0] sm:$0xff]
      %v199 = vld [vmem:[%s172 + $0xc8] sm:$0xff]
      %v200 = vld [vmem:[%s172 + $0xd8] sm:$0xff]
      %v201 = vld [vmem:[%s172 + $0xe0] sm:$0xff]
      %v202 = vld [vmem:[%s172 + $0xf0] sm:$0xff]
      %v203 = vld [vmem:[%s172 + $0xf8] sm:$0xff]
      %v204 = vld [vmem:[%s172 + $0x108] sm:$0xff]
      %v205 = vld [vmem:[%s172 + $0x110] sm:$0xff]
      %v206 = vld [vmem:[%s172 + $0x120] sm:$0xff]
      %v207 = vld [vmem:[%s172 + $0x128] sm:$0xff]
      %v208 = vld [vmem:[%s172 + $0x138] sm:$0xff]
      %v209 = vld [vmem:[%s172 + $0x140] sm:$0xff]
      %v210 = vld [vmem:[%s172 + $0x150] sm:$0xff]
      %v211 = vld [vmem:[%s172 + $0x158] sm:$0xff]
      %v212 = vld [vmem:[%s172 + $0x168] sm:$0xff]
      %v213 = vld [vmem:[%s172 + $0x170] sm:$0xff]
      %v214 = vld [vmem:[%s172 + $0x1] sm:$0xff]
      %v215 = vld [vmem:[%s172 + $0x9] sm:$0xff]
      %v216 = vld [vmem:[%s172 + $0x19] sm:$0xff]
      %v217 = vld [vmem:[%s172 + $0x21] sm:$0xff]
      %v218 = vld [vmem:[%s172 + $0x31] sm:$0xff]
      %v219 = vld [vmem:[%s172 + $0x39] sm:$0xff]
      %v220 = vld [vmem:[%s172 + $0x49] sm:$0xff]
      %v221 = vld [vmem:[%s172 + $0x51] sm:$0xff]
      %v222 = vld [vmem:[%s172 + $0x61] sm:$0xff]
      %v223 = vld [vmem:[%s172 + $0x69] sm:$0xff]
      %v224 = vld [vmem:[%s172 + $0x79] sm:$0xff]
      %v225 = vld [vmem:[%s172 + $0x81] sm:$0xff]
      %v226 = vld [vmem:[%s172 + $0x91] sm:$0xff]
      %v227 = vld [vmem:[%s172 + $0x99] sm:$0xff]
      %v228 = vld [vmem:[%s172 + $0xa9] sm:$0xff]
      %v229 = vld [vmem:[%s172 + $0xb1] sm:$0xff]
      %v230 = vld [vmem:[%s172 + $0xc1] sm:$0xff]
      %v231 = vld [vmem:[%s172 + $0xc9] sm:$0xff]
      %v232 = vld [vmem:[%s172 + $0xd9] sm:$0xff]
      %v233 = vld [vmem:[%s172 + $0xe1] sm:$0xff]
      %v234 = vld [vmem:[%s172 + $0xf1] sm:$0xff]
      %v235 = vld [vmem:[%s172 + $0xf9] sm:$0xff]
      %v236 = vld [vmem:[%s172 + $0x109] sm:$0xff]
      %v237 = vld [vmem:[%s172 + $0x111] sm:$0xff]
      %v238 = vld [vmem:[%s172 + $0x121] sm:$0xff]
      %v239 = vld [vmem:[%s172 + $0x129] sm:$0xff]
      %v240 = vld [vmem:[%s172 + $0x139] sm:$0xff]
      %v241 = vld [vmem:[%s172 + $0x141] sm:$0xff]
      %v242 = vld [vmem:[%s172 + $0x151] sm:$0xff]
      %v243 = vld [vmem:[%s172 + $0x159] sm:$0xff]
      %v244 = vld [vmem:[%s172 + $0x169] sm:$0xff]
      %v245 = vld [vmem:[%s172 + $0x171] sm:$0xff]
      %v246 = vmax.f32 %v182, %v214
      %v247 = vmax.f32 %v183, %v215
      %v248 = vmax.f32 %v184, %v216
      %v249 = vmax.f32 %v185, %v217
      %v250 = vmax.f32 %v186, %v218
      %v251 = vmax.f32 %v187, %v219
      %v252 = vmax.f32 %v188, %v220
      %v253 = vmax.f32 %v189, %v221
      %v254 = vmax.f32 %v190, %v222
      %v255 = vmax.f32 %v191, %v223
      %v256 = vmax.f32 %v192, %v224
      %v257 = vmax.f32 %v193, %v225
      %v258 = vmax.f32 %v194, %v226
      %v259 = vmax.f32 %v195, %v227
      %v260 = vmax.f32 %v196, %v228
      %v261 = vmax.f32 %v197, %v229
      %v262 = vmax.f32 %v198, %v230
      %v263 = vmax.f32 %v199, %v231
      %v264 = vmax.f32 %v200, %v232
      %v265 = vmax.f32 %v201, %v233
      %v266 = vmax.f32 %v202, %v234
      %v267 = vmax.f32 %v203, %v235
      %v268 = vmax.f32 %v204, %v236
      %v269 = vmax.f32 %v205, %v237
      %v270 = vmax.f32 %v206, %v238
      %v271 = vmax.f32 %v207, %v239
      %v272 = vmax.f32 %v208, %v240
      %v273 = vmax.f32 %v209, %v241
      %v274 = vmax.f32 %v210, %v242
      %v275 = vmax.f32 %v211, %v243
      %v276 = vmax.f32 %v212, %v244
      %v277 = vmax.f32 %v213, %v245
      %v278 = vld [vmem:[%s172 + $0x2] sm:$0xff]
      %v279 = vld [vmem:[%s172 + $0xa] sm:$0xff]
      %v280 = vld [vmem:[%s172 + $0x1a] sm:$0xff]
      %v281 = vld [vmem:[%s172 + $0x22] sm:$0xff]
      %v282 = vld [vmem:[%s172 + $0x32] sm:$0xff]
      %v283 = vld [vmem:[%s172 + $0x3a] sm:$0xff]
      %v284 = vld [vmem:[%s172 + $0x4a] sm:$0xff]
      %v285 = vld [vmem:[%s172 + $0x52] sm:$0xff]
      %v286 = vld [vmem:[%s172 + $0x62] sm:$0xff]
      %v287 = vld [vmem:[%s172 + $0x6a] sm:$0xff]
      %v288 = vld [vmem:[%s172 + $0x7a] sm:$0xff]
      %v289 = vld [vmem:[%s172 + $0x82] sm:$0xff]
      %v290 = vld [vmem:[%s172 + $0x92] sm:$0xff]
      %v291 = vld [vmem:[%s172 + $0x9a] sm:$0xff]
      %v292 = vld [vmem:[%s172 + $0xaa] sm:$0xff]
      %v293 = vld [vmem:[%s172 + $0xb2] sm:$0xff]
      %v294 = vld [vmem:[%s172 + $0xc2] sm:$0xff]
      %v295 = vld [vmem:[%s172 + $0xca] sm:$0xff]
      %v296 = vld [vmem:[%s172 + $0xda] sm:$0xff]
      %v297 = vld [vmem:[%s172 + $0xe2] sm:$0xff]
      %v298 = vld [vmem:[%s172 + $0xf2] sm:$0xff]
      %v299 = vld [vmem:[%s172 + $0xfa] sm:$0xff]
      %v300 = vld [vmem:[%s172 + $0x10a] sm:$0xff]
      %v301 = vld [vmem:[%s172 + $0x112] sm:$0xff]
      %v302 = vld [vmem:[%s172 + $0x122] sm:$0xff]
      %v303 = vld [vmem:[%s172 + $0x12a] sm:$0xff]
      %v304 = vld [vmem:[%s172 + $0x13a] sm:$0xff]
      %v305 = vld [vmem:[%s172 + $0x142] sm:$0xff]
      %v306 = vld [vmem:[%s172 + $0x152] sm:$0xff]
      %v307 = vld [vmem:[%s172 + $0x15a] sm:$0xff]
      %v308 = vld [vmem:[%s172 + $0x16a] sm:$0xff]
      %v309 = vld [vmem:[%s172 + $0x172] sm:$0xff]
      %v310 = vmax.f32 %v246, %v278
      %v311 = vmax.f32 %v247, %v279
      %v312 = vmax.f32 %v248, %v280
      %v313 = vmax.f32 %v249, %v281
      %v314 = vmax.f32 %v250, %v282
      %v315 = vmax.f32 %v251, %v283
      %v316 = vmax.f32 %v252, %v284
      %v317 = vmax.f32 %v253, %v285
      %v318 = vmax.f32 %v254, %v286
      %v319 = vmax.f32 %v255, %v287
      %v320 = vmax.f32 %v256, %v288
      %v321 = vmax.f32 %v257, %v289
      %v322 = vmax.f32 %v258, %v290
      %v323 = vmax.f32 %v259, %v291
      %v324 = vmax.f32 %v260, %v292
      %v325 = vmax.f32 %v261, %v293
      %v326 = vmax.f32 %v262, %v294
      %v327 = vmax.f32 %v263, %v295
      %v328 = vmax.f32 %v264, %v296
      %v329 = vmax.f32 %v265, %v297
      %v330 = vmax.f32 %v266, %v298
      %v331 = vmax.f32 %v267, %v299
      %v332 = vmax.f32 %v268, %v300
      %v333 = vmax.f32 %v269, %v301
      %v334 = vmax.f32 %v270, %v302
      %v335 = vmax.f32 %v271, %v303
      %v336 = vmax.f32 %v272, %v304
      %v337 = vmax.f32 %v273, %v305
      %v338 = vmax.f32 %v274, %v306
      %v339 = vmax.f32 %v275, %v307
      %v340 = vmax.f32 %v276, %v308
      %v341 = vmax.f32 %v277, %v309
      %s342 = scalar_lea.vmem %s172, 24
      %v343 = vld [vmem:[%s342] sm:$0xff]
      %v344 = vld [vmem:[%s342 + $0x8] sm:$0xff]
      %v345 = vld [vmem:[%s342 + $0x18] sm:$0xff]
      %v346 = vld [vmem:[%s342 + $0x20] sm:$0xff]
      %v347 = vld [vmem:[%s342 + $0x30] sm:$0xff]
      %v348 = vld [vmem:[%s342 + $0x38] sm:$0xff]
      %v349 = vld [vmem:[%s342 + $0x48] sm:$0xff]
      %v350 = vld [vmem:[%s342 + $0x50] sm:$0xff]
      %v351 = vld [vmem:[%s342 + $0x60] sm:$0xff]
      %v352 = vld [vmem:[%s342 + $0x68] sm:$0xff]
      %v353 = vld [vmem:[%s342 + $0x78] sm:$0xff]
      %v354 = vld [vmem:[%s342 + $0x80] sm:$0xff]
      %v355 = vld [vmem:[%s342 + $0x90] sm:$0xff]
      %v356 = vld [vmem:[%s342 + $0x98] sm:$0xff]
      %v357 = vld [vmem:[%s342 + $0xa8] sm:$0xff]
      %v358 = vld [vmem:[%s342 + $0xb0] sm:$0xff]
      %v359 = vld [vmem:[%s342 + $0xc0] sm:$0xff]
      %v360 = vld [vmem:[%s342 + $0xc8] sm:$0xff]
      %v361 = vld [vmem:[%s342 + $0xd8] sm:$0xff]
      %v362 = vld [vmem:[%s342 + $0xe0] sm:$0xff]
      %v363 = vld [vmem:[%s342 + $0xf0] sm:$0xff]
      %v364 = vld [vmem:[%s342 + $0xf8] sm:$0xff]
      %v365 = vld [vmem:[%s342 + $0x108] sm:$0xff]
      %v366 = vld [vmem:[%s342 + $0x110] sm:$0xff]
      %v367 = vld [vmem:[%s342 + $0x120] sm:$0xff]
      %v368 = vld [vmem:[%s342 + $0x128] sm:$0xff]
      %v369 = vld [vmem:[%s342 + $0x138] sm:$0xff]
      %v370 = vld [vmem:[%s342 + $0x140] sm:$0xff]
      %v371 = vld [vmem:[%s342 + $0x150] sm:$0xff]
      %v372 = vld [vmem:[%s342 + $0x158] sm:$0xff]
      %v373 = vld [vmem:[%s342 + $0x168] sm:$0xff]
      %v374 = vld [vmem:[%s342 + $0x170] sm:$0xff]
      %v375 = vmax.f32 %v310, %v343
      %v376 = vmax.f32 %v311, %v344
      %v377 = vmax.f32 %v312, %v345
      %v378 = vmax.f32 %v313, %v346
      %v379 = vmax.f32 %v314, %v347
      %v380 = vmax.f32 %v315, %v348
      %v381 = vmax.f32 %v316, %v349
      %v382 = vmax.f32 %v317, %v350
      %v383 = vmax.f32 %v318, %v351
      %v384 = vmax.f32 %v319, %v352
      %v385 = vmax.f32 %v320, %v353
      %v386 = vmax.f32 %v321, %v354
      %v387 = vmax.f32 %v322, %v355
      %v388 = vmax.f32 %v323, %v356
      %v389 = vmax.f32 %v324, %v357
      %v390 = vmax.f32 %v325, %v358
      %v391 = vmax.f32 %v326, %v359
      %v392 = vmax.f32 %v327, %v360
      %v393 = vmax.f32 %v328, %v361
      %v394 = vmax.f32 %v329, %v362
      %v395 = vmax.f32 %v330, %v363
      %v396 = vmax.f32 %v331, %v364
      %v397 = vmax.f32 %v332, %v365
      %v398 = vmax.f32 %v333, %v366
      %v399 = vmax.f32 %v334, %v367
      %v400 = vmax.f32 %v335, %v368
      %v401 = vmax.f32 %v336, %v369
      %v402 = vmax.f32 %v337, %v370
      %v403 = vmax.f32 %v338, %v371
      %v404 = vmax.f32 %v339, %v372
      %v405 = vmax.f32 %v340, %v373
      %v406 = vmax.f32 %v341, %v374
      %v407 = vld [vmem:[%s342 + $0x1] sm:$0xff]
      %v408 = vld [vmem:[%s342 + $0x9] sm:$0xff]
      %v409 = vld [vmem:[%s342 + $0x19] sm:$0xff]
      %v410 = vld [vmem:[%s342 + $0x21] sm:$0xff]
      %v411 = vld [vmem:[%s342 + $0x31] sm:$0xff]
      %v412 = vld [vmem:[%s342 + $0x39] sm:$0xff]
      %v413 = vld [vmem:[%s342 + $0x49] sm:$0xff]
      %v414 = vld [vmem:[%s342 + $0x51] sm:$0xff]
      %v415 = vld [vmem:[%s342 + $0x61] sm:$0xff]
      %v416 = vld [vmem:[%s342 + $0x69] sm:$0xff]
      %v417 = vld [vmem:[%s342 + $0x79] sm:$0xff]
      %v418 = vld [vmem:[%s342 + $0x81] sm:$0xff]
      %v419 = vld [vmem:[%s342 + $0x91] sm:$0xff]
      %v420 = vld [vmem:[%s342 + $0x99] sm:$0xff]
      %v421 = vld [vmem:[%s342 + $0xa9] sm:$0xff]
      %v422 = vld [vmem:[%s342 + $0xb1] sm:$0xff]
      %v423 = vld [vmem:[%s342 + $0xc1] sm:$0xff]
      %v424 = vld [vmem:[%s342 + $0xc9] sm:$0xff]
      %v425 = vld [vmem:[%s342 + $0xd9] sm:$0xff]
      %v426 = vld [vmem:[%s342 + $0xe1] sm:$0xff]
      %v427 = vld [vmem:[%s342 + $0xf1] sm:$0xff]
      %v428 = vld [vmem:[%s342 + $0xf9] sm:$0xff]
      %v429 = vld [vmem:[%s342 + $0x109] sm:$0xff]
      %v430 = vld [vmem:[%s342 + $0x111] sm:$0xff]
      %v431 = vld [vmem:[%s342 + $0x121] sm:$0xff]
      %v432 = vld [vmem:[%s342 + $0x129] sm:$0xff]
      %v433 = vld [vmem:[%s342 + $0x139] sm:$0xff]
      %v434 = vld [vmem:[%s342 + $0x141] sm:$0xff]
      %v435 = vld [vmem:[%s342 + $0x151] sm:$0xff]
      %v436 = vld [vmem:[%s342 + $0x159] sm:$0xff]
      %v437 = vld [vmem:[%s342 + $0x169] sm:$0xff]
      %v438 = vld [vmem:[%s342 + $0x171] sm:$0xff]
      %v439 = vmax.f32 %v375, %v407
      %v440 = vmax.f32 %v376, %v408
      %v441 = vmax.f32 %v377, %v409
      %v442 = vmax.f32 %v378, %v410
      %v443 = vmax.f32 %v379, %v411
      %v444 = vmax.f32 %v380, %v412
      %v445 = vmax.f32 %v381, %v413
      %v446 = vmax.f32 %v382, %v414
      %v447 = vmax.f32 %v383, %v415
      %v448 = vmax.f32 %v384, %v416
      %v449 = vmax.f32 %v385, %v417
      %v450 = vmax.f32 %v386, %v418
      %v451 = vmax.f32 %v387, %v419
      %v452 = vmax.f32 %v388, %v420
      %v453 = vmax.f32 %v389, %v421
      %v454 = vmax.f32 %v390, %v422
      %v455 = vmax.f32 %v391, %v423
      %v456 = vmax.f32 %v392, %v424
      %v457 = vmax.f32 %v393, %v425
      %v458 = vmax.f32 %v394, %v426
      %v459 = vmax.f32 %v395, %v427
      %v460 = vmax.f32 %v396, %v428
      %v461 = vmax.f32 %v397, %v429
      %v462 = vmax.f32 %v398, %v430
      %v463 = vmax.f32 %v399, %v431
      %v464 = vmax.f32 %v400, %v432
      %v465 = vmax.f32 %v401, %v433
      %v466 = vmax.f32 %v402, %v434
      %v467 = vmax.f32 %v403, %v435
      %v468 = vmax.f32 %v404, %v436
      %v469 = vmax.f32 %v405, %v437
      %v470 = vmax.f32 %v406, %v438
      %v471 = vld [vmem:[%s342 + $0x2] sm:$0xff]
      %v472 = vld [vmem:[%s342 + $0xa] sm:$0xff]
      %v473 = vld [vmem:[%s342 + $0x1a] sm:$0xff]
      %v474 = vld [vmem:[%s342 + $0x22] sm:$0xff]
      %v475 = vld [vmem:[%s342 + $0x32] sm:$0xff]
      %v476 = vld [vmem:[%s342 + $0x3a] sm:$0xff]
      %v477 = vld [vmem:[%s342 + $0x4a] sm:$0xff]
      %v478 = vld [vmem:[%s342 + $0x52] sm:$0xff]
      %v479 = vld [vmem:[%s342 + $0x62] sm:$0xff]
      %v480 = vld [vmem:[%s342 + $0x6a] sm:$0xff]
      %v481 = vld [vmem:[%s342 + $0x7a] sm:$0xff]
      %v482 = vld [vmem:[%s342 + $0x82] sm:$0xff]
      %v483 = vld [vmem:[%s342 + $0x92] sm:$0xff]
      %v484 = vld [vmem:[%s342 + $0x9a] sm:$0xff]
      %v485 = vld [vmem:[%s342 + $0xaa] sm:$0xff]
      %v486 = vld [vmem:[%s342 + $0xb2] sm:$0xff]
      %v487 = vld [vmem:[%s342 + $0xc2] sm:$0xff]
      %v488 = vld [vmem:[%s342 + $0xca] sm:$0xff]
      %v489 = vld [vmem:[%s342 + $0xda] sm:$0xff]
      %v490 = vld [vmem:[%s342 + $0xe2] sm:$0xff]
      %v491 = vld [vmem:[%s342 + $0xf2] sm:$0xff]
      %v492 = vld [vmem:[%s342 + $0xfa] sm:$0xff]
      %v493 = vld [vmem:[%s342 + $0x10a] sm:$0xff]
      %v494 = vld [vmem:[%s342 + $0x112] sm:$0xff]
      %v495 = vld [vmem:[%s342 + $0x122] sm:$0xff]
      %v496 = vld [vmem:[%s342 + $0x12a] sm:$0xff]
      %v497 = vld [vmem:[%s342 + $0x13a] sm:$0xff]
      %v498 = vld [vmem:[%s342 + $0x142] sm:$0xff]
      %v499 = vld [vmem:[%s342 + $0x152] sm:$0xff]
      %v500 = vld [vmem:[%s342 + $0x15a] sm:$0xff]
      %v501 = vld [vmem:[%s342 + $0x16a] sm:$0xff]
      %v502 = vld [vmem:[%s342 + $0x172] sm:$0xff]
      %v503 = vmax.f32 %v439, %v471
      %v504 = vmax.f32 %v440, %v472
      %v505 = vmax.f32 %v441, %v473
      %v506 = vmax.f32 %v442, %v474
      %v507 = vmax.f32 %v443, %v475
      %v508 = vmax.f32 %v444, %v476
      %v509 = vmax.f32 %v445, %v477
      %v510 = vmax.f32 %v446, %v478
      %v511 = vmax.f32 %v447, %v479
      %v512 = vmax.f32 %v448, %v480
      %v513 = vmax.f32 %v449, %v481
      %v514 = vmax.f32 %v450, %v482
      %v515 = vmax.f32 %v451, %v483
      %v516 = vmax.f32 %v452, %v484
      %v517 = vmax.f32 %v453, %v485
      %v518 = vmax.f32 %v454, %v486
      %v519 = vmax.f32 %v455, %v487
      %v520 = vmax.f32 %v456, %v488
      %v521 = vmax.f32 %v457, %v489
      %v522 = vmax.f32 %v458, %v490
      %v523 = vmax.f32 %v459, %v491
      %v524 = vmax.f32 %v460, %v492
      %v525 = vmax.f32 %v461, %v493
      %v526 = vmax.f32 %v462, %v494
      %v527 = vmax.f32 %v463, %v495
      %v528 = vmax.f32 %v464, %v496
      %v529 = vmax.f32 %v465, %v497
      %v530 = vmax.f32 %v466, %v498
      %v531 = vmax.f32 %v467, %v499
      %v532 = vmax.f32 %v468, %v500
      %v533 = vmax.f32 %v469, %v501
      %v534 = vmax.f32 %v470, %v502
      %s535 = scalar_lea.vmem %s172, 48
      %v536 = vld [vmem:[%s535] sm:$0xff]
      %v537 = vld [vmem:[%s535 + $0x8] sm:$0xff]
      %v538 = vld [vmem:[%s535 + $0x18] sm:$0xff]
      %v539 = vld [vmem:[%s535 + $0x20] sm:$0xff]
      %v540 = vld [vmem:[%s535 + $0x30] sm:$0xff]
      %v541 = vld [vmem:[%s535 + $0x38] sm:$0xff]
      %v542 = vld [vmem:[%s535 + $0x48] sm:$0xff]
      %v543 = vld [vmem:[%s535 + $0x50] sm:$0xff]
      %v544 = vld [vmem:[%s535 + $0x60] sm:$0xff]
      %v545 = vld [vmem:[%s535 + $0x68] sm:$0xff]
      %v546 = vld [vmem:[%s535 + $0x78] sm:$0xff]
      %v547 = vld [vmem:[%s535 + $0x80] sm:$0xff]
      %v548 = vld [vmem:[%s535 + $0x90] sm:$0xff]
      %v549 = vld [vmem:[%s535 + $0x98] sm:$0xff]
      %v550 = vld [vmem:[%s535 + $0xa8] sm:$0xff]
      %v551 = vld [vmem:[%s535 + $0xb0] sm:$0xff]
      %v552 = vld [vmem:[%s535 + $0xc0] sm:$0xff]
      %v553 = vld [vmem:[%s535 + $0xc8] sm:$0xff]
      %v554 = vld [vmem:[%s535 + $0xd8] sm:$0xff]
      %v555 = vld [vmem:[%s535 + $0xe0] sm:$0xff]
      %v556 = vld [vmem:[%s535 + $0xf0] sm:$0xff]
      %v557 = vld [vmem:[%s535 + $0xf8] sm:$0xff]
      %v558 = vld [vmem:[%s535 + $0x108] sm:$0xff]
      %v559 = vld [vmem:[%s535 + $0x110] sm:$0xff]
      %v560 = vld [vmem:[%s535 + $0x120] sm:$0xff]
      %v561 = vld [vmem:[%s535 + $0x128] sm:$0xff]
      %v562 = vld [vmem:[%s535 + $0x138] sm:$0xff]
      %v563 = vld [vmem:[%s535 + $0x140] sm:$0xff]
      %v564 = vld [vmem:[%s535 + $0x150] sm:$0xff]
      %v565 = vld [vmem:[%s535 + $0x158] sm:$0xff]
      %v566 = vld [vmem:[%s535 + $0x168] sm:$0xff]
      %v567 = vld [vmem:[%s535 + $0x170] sm:$0xff]
      %v568 = vmax.f32 %v503, %v536
      %v569 = vmax.f32 %v504, %v537
      %v570 = vmax.f32 %v505, %v538
      %v571 = vmax.f32 %v506, %v539
      %v572 = vmax.f32 %v507, %v540
      %v573 = vmax.f32 %v508, %v541
      %v574 = vmax.f32 %v509, %v542
      %v575 = vmax.f32 %v510, %v543
      %v576 = vmax.f32 %v511, %v544
      %v577 = vmax.f32 %v512, %v545
      %v578 = vmax.f32 %v513, %v546
      %v579 = vmax.f32 %v514, %v547
      %v580 = vmax.f32 %v515, %v548
      %v581 = vmax.f32 %v516, %v549
      %v582 = vmax.f32 %v517, %v550
      %v583 = vmax.f32 %v518, %v551
      %v584 = vmax.f32 %v519, %v552
      %v585 = vmax.f32 %v520, %v553
      %v586 = vmax.f32 %v521, %v554
      %v587 = vmax.f32 %v522, %v555
      %v588 = vmax.f32 %v523, %v556
      %v589 = vmax.f32 %v524, %v557
      %v590 = vmax.f32 %v525, %v558
      %v591 = vmax.f32 %v526, %v559
      %v592 = vmax.f32 %v527, %v560
      %v593 = vmax.f32 %v528, %v561
      %v594 = vmax.f32 %v529, %v562
      %v595 = vmax.f32 %v530, %v563
      %v596 = vmax.f32 %v531, %v564
      %v597 = vmax.f32 %v532, %v565
      %v598 = vmax.f32 %v533, %v566
      %v599 = vmax.f32 %v534, %v567
      %v600 = vld [vmem:[%s535 + $0x1] sm:$0xff]
      %v601 = vld [vmem:[%s535 + $0x9] sm:$0xff]
      %v602 = vld [vmem:[%s535 + $0x19] sm:$0xff]
      %v603 = vld [vmem:[%s535 + $0x21] sm:$0xff]
      %v604 = vld [vmem:[%s535 + $0x31] sm:$0xff]
      %v605 = vld [vmem:[%s535 + $0x39] sm:$0xff]
      %v606 = vld [vmem:[%s535 + $0x49] sm:$0xff]
      %v607 = vld [vmem:[%s535 + $0x51] sm:$0xff]
      %v608 = vld [vmem:[%s535 + $0x61] sm:$0xff]
      %v609 = vld [vmem:[%s535 + $0x69] sm:$0xff]
      %v610 = vld [vmem:[%s535 + $0x79] sm:$0xff]
      %v611 = vld [vmem:[%s535 + $0x81] sm:$0xff]
      %v612 = vld [vmem:[%s535 + $0x91] sm:$0xff]
      %v613 = vld [vmem:[%s535 + $0x99] sm:$0xff]
      %v614 = vld [vmem:[%s535 + $0xa9] sm:$0xff]
      %v615 = vld [vmem:[%s535 + $0xb1] sm:$0xff]
      %v616 = vld [vmem:[%s535 + $0xc1] sm:$0xff]
      %v617 = vld [vmem:[%s535 + $0xc9] sm:$0xff]
      %v618 = vld [vmem:[%s535 + $0xd9] sm:$0xff]
      %v619 = vld [vmem:[%s535 + $0xe1] sm:$0xff]
      %v620 = vld [vmem:[%s535 + $0xf1] sm:$0xff]
      %v621 = vld [vmem:[%s535 + $0xf9] sm:$0xff]
      %v622 = vld [vmem:[%s535 + $0x109] sm:$0xff]
      %v623 = vld [vmem:[%s535 + $0x111] sm:$0xff]
      %v624 = vld [vmem:[%s535 + $0x121] sm:$0xff]
      %v625 = vld [vmem:[%s535 + $0x129] sm:$0xff]
      %v626 = vld [vmem:[%s535 + $0x139] sm:$0xff]
      %v627 = vld [vmem:[%s535 + $0x141] sm:$0xff]
      %v628 = vld [vmem:[%s535 + $0x151] sm:$0xff]
      %v629 = vld [vmem:[%s535 + $0x159] sm:$0xff]
      %v630 = vld [vmem:[%s535 + $0x169] sm:$0xff]
      %v631 = vld [vmem:[%s535 + $0x171] sm:$0xff]
      %v632 = vmax.f32 %v568, %v600
      %v633 = vmax.f32 %v569, %v601
      %v634 = vmax.f32 %v570, %v602
      %v635 = vmax.f32 %v571, %v603
      %v636 = vmax.f32 %v572, %v604
      %v637 = vmax.f32 %v573, %v605
      %v638 = vmax.f32 %v574, %v606
      %v639 = vmax.f32 %v575, %v607
      %v640 = vmax.f32 %v576, %v608
      %v641 = vmax.f32 %v577, %v609
      %v642 = vmax.f32 %v578, %v610
      %v643 = vmax.f32 %v579, %v611
      %v644 = vmax.f32 %v580, %v612
      %v645 = vmax.f32 %v581, %v613
      %v646 = vmax.f32 %v582, %v614
      %v647 = vmax.f32 %v583, %v615
      %v648 = vmax.f32 %v584, %v616
      %v649 = vmax.f32 %v585, %v617
      %v650 = vmax.f32 %v586, %v618
      %v651 = vmax.f32 %v587, %v619
      %v652 = vmax.f32 %v588, %v620
      %v653 = vmax.f32 %v589, %v621
      %v654 = vmax.f32 %v590, %v622
      %v655 = vmax.f32 %v591, %v623
      %v656 = vmax.f32 %v592, %v624
      %v657 = vmax.f32 %v593, %v625
      %v658 = vmax.f32 %v594, %v626
      %v659 = vmax.f32 %v595, %v627
      %v660 = vmax.f32 %v596, %v628
      %v661 = vmax.f32 %v597, %v629
      %v662 = vmax.f32 %v598, %v630
      %v663 = vmax.f32 %v599, %v631
      %v664 = vld [vmem:[%s535 + $0x2] sm:$0xff]
      %v665 = vld [vmem:[%s535 + $0xa] sm:$0xff]
      %v666 = vld [vmem:[%s535 + $0x1a] sm:$0xff]
      %v667 = vld [vmem:[%s535 + $0x22] sm:$0xff]
      %v668 = vld [vmem:[%s535 + $0x32] sm:$0xff]
      %v669 = vld [vmem:[%s535 + $0x3a] sm:$0xff]
      %v670 = vld [vmem:[%s535 + $0x4a] sm:$0xff]
      %v671 = vld [vmem:[%s535 + $0x52] sm:$0xff]
      %v672 = vld [vmem:[%s535 + $0x62] sm:$0xff]
      %v673 = vld [vmem:[%s535 + $0x6a] sm:$0xff]
      %v674 = vld [vmem:[%s535 + $0x7a] sm:$0xff]
      %v675 = vld [vmem:[%s535 + $0x82] sm:$0xff]
      %v676 = vld [vmem:[%s535 + $0x92] sm:$0xff]
      %v677 = vld [vmem:[%s535 + $0x9a] sm:$0xff]
      %v678 = vld [vmem:[%s535 + $0xaa] sm:$0xff]
      %v679 = vld [vmem:[%s535 + $0xb2] sm:$0xff]
      %v680 = vld [vmem:[%s535 + $0xc2] sm:$0xff]
      %v681 = vld [vmem:[%s535 + $0xca] sm:$0xff]
      %v682 = vld [vmem:[%s535 + $0xda] sm:$0xff]
      %v683 = vld [vmem:[%s535 + $0xe2] sm:$0xff]
      %v684 = vld [vmem:[%s535 + $0xf2] sm:$0xff]
      %v685 = vld [vmem:[%s535 + $0xfa] sm:$0xff]
      %v686 = vld [vmem:[%s535 + $0x10a] sm:$0xff]
      %v687 = vld [vmem:[%s535 + $0x112] sm:$0xff]
      %v688 = vld [vmem:[%s535 + $0x122] sm:$0xff]
      %v689 = vld [vmem:[%s535 + $0x12a] sm:$0xff]
      %v690 = vld [vmem:[%s535 + $0x13a] sm:$0xff]
      %v691 = vld [vmem:[%s535 + $0x142] sm:$0xff]
      %v692 = vld [vmem:[%s535 + $0x152] sm:$0xff]
      %v693 = vld [vmem:[%s535 + $0x15a] sm:$0xff]
      %v694 = vld [vmem:[%s535 + $0x16a] sm:$0xff]
      %v695 = vld [vmem:[%s535 + $0x172] sm:$0xff]
      %v696 = vmax.f32 %v632, %v664
      %v697 = vmax.f32 %v633, %v665
      %v698 = vmax.f32 %v634, %v666
      %v699 = vmax.f32 %v635, %v667
      %v700 = vmax.f32 %v636, %v668
      %v701 = vmax.f32 %v637, %v669
      %v702 = vmax.f32 %v638, %v670
      %v703 = vmax.f32 %v639, %v671
      %v704 = vmax.f32 %v640, %v672
      %v705 = vmax.f32 %v641, %v673
      %v706 = vmax.f32 %v642, %v674
      %v707 = vmax.f32 %v643, %v675
      %v708 = vmax.f32 %v644, %v676
      %v709 = vmax.f32 %v645, %v677
      %v710 = vmax.f32 %v646, %v678
      %v711 = vmax.f32 %v647, %v679
      %v712 = vmax.f32 %v648, %v680
      %v713 = vmax.f32 %v649, %v681
      %v714 = vmax.f32 %v650, %v682
      %v715 = vmax.f32 %v651, %v683
      %v716 = vmax.f32 %v652, %v684
      %v717 = vmax.f32 %v653, %v685
      %v718 = vmax.f32 %v654, %v686
      %v719 = vmax.f32 %v655, %v687
      %v720 = vmax.f32 %v656, %v688
      %v721 = vmax.f32 %v657, %v689
      %v722 = vmax.f32 %v658, %v690
      %v723 = vmax.f32 %v659, %v691
      %v724 = vmax.f32 %v660, %v692
      %v725 = vmax.f32 %v661, %v693
      %v726 = vmax.f32 %v662, %v694
      %v727 = vmax.f32 %v663, %v695
      %vm728 = vcmask 31744
      %729 = vst.msk [vmem:[%s177] sm:$0xff] %vm728, %v696
      %730 = vst.msk [vmem:[%s177 + $0x8] sm:$0xff] %vm728, %v697
      %731 = vst.msk [vmem:[%s177 + $0x10] sm:$0xff] %vm728, %v698
      %732 = vst.msk [vmem:[%s177 + $0x18] sm:$0xff] %vm728, %v699
      %733 = vst.msk [vmem:[%s177 + $0x20] sm:$0xff] %vm728, %v700
      %734 = vst.msk [vmem:[%s177 + $0x28] sm:$0xff] %vm728, %v701
      %735 = vst.msk [vmem:[%s177 + $0x30] sm:$0xff] %vm728, %v702
      %736 = vst.msk [vmem:[%s177 + $0x38] sm:$0xff] %vm728, %v703
      %737 = vst.msk [vmem:[%s177 + $0x40] sm:$0xff] %vm728, %v704
      %738 = vst.msk [vmem:[%s177 + $0x48] sm:$0xff] %vm728, %v705
      %739 = vst.msk [vmem:[%s177 + $0x50] sm:$0xff] %vm728, %v706
      %740 = vst.msk [vmem:[%s177 + $0x58] sm:$0xff] %vm728, %v707
      %741 = vst.msk [vmem:[%s177 + $0x60] sm:$0xff] %vm728, %v708
      %742 = vst.msk [vmem:[%s177 + $0x68] sm:$0xff] %vm728, %v709
      %743 = vst.msk [vmem:[%s177 + $0x70] sm:$0xff] %vm728, %v710
      %744 = vst.msk [vmem:[%s177 + $0x78] sm:$0xff] %vm728, %v711
      %745 = vst.msk [vmem:[%s177 + $0x80] sm:$0xff] %vm728, %v712
      %746 = vst.msk [vmem:[%s177 + $0x88] sm:$0xff] %vm728, %v713
      %747 = vst.msk [vmem:[%s177 + $0x90] sm:$0xff] %vm728, %v714
      %748 = vst.msk [vmem:[%s177 + $0x98] sm:$0xff] %vm728, %v715
      %749 = vst.msk [vmem:[%s177 + $0xa0] sm:$0xff] %vm728, %v716
      %750 = vst.msk [vmem:[%s177 + $0xa8] sm:$0xff] %vm728, %v717
      %751 = vst.msk [vmem:[%s177 + $0xb0] sm:$0xff] %vm728, %v718
      %752 = vst.msk [vmem:[%s177 + $0xb8] sm:$0xff] %vm728, %v719
      %753 = vst.msk [vmem:[%s177 + $0xc0] sm:$0xff] %vm728, %v720
      %754 = vst.msk [vmem:[%s177 + $0xc8] sm:$0xff] %vm728, %v721
      %755 = vst.msk [vmem:[%s177 + $0xd0] sm:$0xff] %vm728, %v722
      %756 = vst.msk [vmem:[%s177 + $0xd8] sm:$0xff] %vm728, %v723
      %757 = vst.msk [vmem:[%s177 + $0xe0] sm:$0xff] %vm728, %v724
      %758 = vst.msk [vmem:[%s177 + $0xe8] sm:$0xff] %vm728, %v725
      %759 = vst.msk [vmem:[%s177 + $0xf0] sm:$0xff] %vm728, %v726
      %760 = vst.msk [vmem:[%s177 + $0xf8] sm:$0xff] %vm728, %v727
      %v761 = vsel %vm728, %v696, 0.0
      %v762 = vsel %vm728, %v697, 0.0
      %v763 = vadd.f32 %v761, %v762
      %v764 = vsel %vm728, %v698, 0.0
      %v765 = vadd.f32 %v763, %v764
      %v766 = vsel %vm728, %v699, 0.0
      %v767 = vadd.f32 %v765, %v766
      %v768 = vsel %vm728, %v700, 0.0
      %v769 = vadd.f32 %v767, %v768
      %v770 = vsel %vm728, %v701, 0.0
      %v771 = vadd.f32 %v769, %v770
      %v772 = vsel %vm728, %v702, 0.0
      %v773 = vadd.f32 %v771, %v772
      %v774 = vsel %vm728, %v703, 0.0
      %v775 = vadd.f32 %v773, %v774
      %v776 = vsel %vm728, %v704, 0.0
      %v777 = vadd.f32 %v775, %v776
      %v778 = vsel %vm728, %v705, 0.0
      %v779 = vadd.f32 %v777, %v778
      %v780 = vsel %vm728, %v706, 0.0
      %v781 = vadd.f32 %v779, %v780
      %v782 = vsel %vm728, %v707, 0.0
      %v783 = vadd.f32 %v781, %v782
      %v784 = vsel %vm728, %v708, 0.0
      %v785 = vadd.f32 %v783, %v784
      %v786 = vsel %vm728, %v709, 0.0
      %v787 = vadd.f32 %v785, %v786
      %v788 = vsel %vm728, %v710, 0.0
      %v789 = vadd.f32 %v787, %v788
      %v790 = vsel %vm728, %v711, 0.0
      %v791 = vadd.f32 %v789, %v790
      %v792 = vsel %vm728, %v712, 0.0
      %v793 = vadd.f32 %v791, %v792
      %v794 = vsel %vm728, %v713, 0.0
      %v795 = vadd.f32 %v793, %v794
      %v796 = vsel %vm728, %v714, 0.0
      %v797 = vadd.f32 %v795, %v796
      %v798 = vsel %vm728, %v715, 0.0
      %v799 = vadd.f32 %v797, %v798
      %v800 = vsel %vm728, %v716, 0.0
      %v801 = vadd.f32 %v799, %v800
      %v802 = vsel %vm728, %v717, 0.0
      %v803 = vadd.f32 %v801, %v802
      %v804 = vsel %vm728, %v718, 0.0
      %v805 = vadd.f32 %v803, %v804
      %v806 = vsel %vm728, %v719, 0.0
      %v807 = vadd.f32 %v805, %v806
      %v808 = vsel %vm728, %v720, 0.0
      %v809 = vadd.f32 %v807, %v808
      %v810 = vsel %vm728, %v721, 0.0
      %v811 = vadd.f32 %v809, %v810
      %v812 = vsel %vm728, %v722, 0.0
      %v813 = vadd.f32 %v811, %v812
      %v814 = vsel %vm728, %v723, 0.0
      %v815 = vadd.f32 %v813, %v814
      %v816 = vsel %vm728, %v724, 0.0
      %v817 = vadd.f32 %v815, %v816
      %v818 = vsel %vm728, %v725, 0.0
      %v819 = vadd.f32 %v817, %v818
      %v820 = vsel %vm728, %v726, 0.0
      %v821 = vadd.f32 %v819, %v820
      %v822 = vsel %vm728, %v727, 0.0
      %v823 = vadd.f32 %v821, %v822
      %v824 = vrot.slane %v823, 4
      %v825 = vadd.f32 %v823, %v824
      %v826 = vrot.slane %v825, 2
      %v827 = vadd.f32 %v825, %v826
      %v828 = vrot.slane %v827, 1
      %v829 = vadd.f32 %v827, %v828
      %v830 = vmul.f32 %v696, %v696
      %v831 = vmul.f32 %v697, %v697
      %v832 = vmul.f32 %v698, %v698
      %v833 = vmul.f32 %v699, %v699
      %v834 = vmul.f32 %v700, %v700
      %v835 = vmul.f32 %v701, %v701
      %v836 = vmul.f32 %v702, %v702
      %v837 = vmul.f32 %v703, %v703
      %v838 = vmul.f32 %v704, %v704
      %v839 = vmul.f32 %v705, %v705
      %v840 = vmul.f32 %v706, %v706
      %v841 = vmul.f32 %v707, %v707
      %v842 = vmul.f32 %v708, %v708
      %v843 = vmul.f32 %v709, %v709
      %v844 = vmul.f32 %v710, %v710
      %v845 = vmul.f32 %v711, %v711
      %v846 = vmul.f32 %v712, %v712
      %v847 = vmul.f32 %v713, %v713
      %v848 = vmul.f32 %v714, %v714
      %v849 = vmul.f32 %v715, %v715
      %v850 = vmul.f32 %v716, %v716
      %v851 = vmul.f32 %v717, %v717
      %v852 = vmul.f32 %v718, %v718
      %v853 = vmul.f32 %v719, %v719
      %v854 = vmul.f32 %v720, %v720
      %v855 = vmul.f32 %v721, %v721
      %v856 = vmul.f32 %v722, %v722
      %v857 = vmul.f32 %v723, %v723
      %v858 = vmul.f32 %v724, %v724
      %v859 = vmul.f32 %v725, %v725
      %v860 = vmul.f32 %v726, %v726
      %v861 = vmul.f32 %v727, %v727
      %v862 = vsel %vm728, %v830, 0.0
      %v863 = vsel %vm728, %v831, 0.0
      %v864 = vadd.f32 %v862, %v863
      %v865 = vsel %vm728, %v832, 0.0
      %v866 = vadd.f32 %v864, %v865
      %v867 = vsel %vm728, %v833, 0.0
      %v868 = vadd.f32 %v866, %v867
      %v869 = vsel %vm728, %v834, 0.0
      %v870 = vadd.f32 %v868, %v869
      %v871 = vsel %vm728, %v835, 0.0
      %v872 = vadd.f32 %v870, %v871
      %v873 = vsel %vm728, %v836, 0.0
      %v874 = vadd.f32 %v872, %v873
      %v875 = vsel %vm728, %v837, 0.0
      %v876 = vadd.f32 %v874, %v875
      %v877 = vsel %vm728, %v838, 0.0
      %v878 = vadd.f32 %v876, %v877
      %v879 = vsel %vm728, %v839, 0.0
      %v880 = vadd.f32 %v878, %v879
      %v881 = vsel %vm728, %v840, 0.0
      %v882 = vadd.f32 %v880, %v881
      %v883 = vsel %vm728, %v841, 0.0
      %v884 = vadd.f32 %v882, %v883
      %v885 = vsel %vm728, %v842, 0.0
      %v886 = vadd.f32 %v884, %v885
      %v887 = vsel %vm728, %v843, 0.0
      %v888 = vadd.f32 %v886, %v887
      %v889 = vsel %vm728, %v844, 0.0
      %v890 = vadd.f32 %v888, %v889
      %v891 = vsel %vm728, %v845, 0.0
      %v892 = vadd.f32 %v890, %v891
      %v893 = vsel %vm728, %v846, 0.0
      %v894 = vadd.f32 %v892, %v893
      %v895 = vsel %vm728, %v847, 0.0
      %v896 = vadd.f32 %v894, %v895
      %v897 = vsel %vm728, %v848, 0.0
      %v898 = vadd.f32 %v896, %v897
      %v899 = vsel %vm728, %v849, 0.0
      %v900 = vadd.f32 %v898, %v899
      %v901 = vsel %vm728, %v850, 0.0
      %v902 = vadd.f32 %v900, %v901
      %v903 = vsel %vm728, %v851, 0.0
      %v904 = vadd.f32 %v902, %v903
      %v905 = vsel %vm728, %v852, 0.0
      %v906 = vadd.f32 %v904, %v905
      %v907 = vsel %vm728, %v853, 0.0
      %v908 = vadd.f32 %v906, %v907
      %v909 = vsel %vm728, %v854, 0.0
      %v910 = vadd.f32 %v908, %v909
      %v911 = vsel %vm728, %v855, 0.0
      %v912 = vadd.f32 %v910, %v911
      %v913 = vsel %vm728, %v856, 0.0
      %v914 = vadd.f32 %v912, %v913
      %v915 = vsel %vm728, %v857, 0.0
      %v916 = vadd.f32 %v914, %v915
      %v917 = vsel %vm728, %v858, 0.0
      %v918 = vadd.f32 %v916, %v917
      %v919 = vsel %vm728, %v859, 0.0
      %v920 = vadd.f32 %v918, %v919
      %v921 = vsel %vm728, %v860, 0.0
      %v922 = vadd.f32 %v920, %v921
      %v923 = vsel %vm728, %v861, 0.0
      %v924 = vadd.f32 %v922, %v923
      %v925 = vrot.slane %v924, 4
      %v926 = vadd.f32 %v924, %v925
      %v927 = vrot.slane %v926, 2
      %v928 = vadd.f32 %v926, %v927
      %v929 = vrot.slane %v928, 1
      %v930 = vadd.f32 %v928, %v929
      %vm931 = vcmask 1040384
      %v932 = vsel %vm931, %v829, %v930
      %vm933 = vcmask 25600
      %934 = vst.msk [vmem:[%s181] sm:$0x3] %vm933, %v932
      %p935 = scmp.lt.s32.totalorder %s15, 1
      %s936 = scalar_select %p935, %s15, 1
      %s937 = smul.addr %s936, 32
      %s938 = smul.addr %s937, 8
      %s939 = scalar_lea.vmem %s2, %s938
      %p940 = scmp.lt.s32.totalorder %s15, 1
      %s941 = scalar_select %p940, %s15, 1
      %s942 = smul.addr %s941, 2
      %s943 = scalar_lea.vmem %s3, %s942
      // Predicated region
      $region29: #{pool_bn_forward.2} parent=27 // pred_check
        %p944 = pneg %p80
      $region30: #{pool_bn_forward.2} parent=27 // pred_check_branch
        %946 = sbr.rel (%p944) target = $region32
      $region31: #{pool_bn_forward.2} parent=27 // pred_region
        _
      $region32: #{pool_bn_forward.2} parent=27 // pred_fallthru
        _
      // Predicated region
      $region33: #{pool_bn_forward.2} parent=27 // pred_check
        %p947 = pneg %p106
      $region34: #{pool_bn_forward.2} parent=27 // pred_check_branch
        %949 = sbr.rel (%p947) target = $region36
      $region35: #{pool_bn_forward.2} parent=27 // pred_region
        _
      $region36: #{pool_bn_forward.2} parent=27 // pred_fallthru
        _
    $region28: #{pool_bn_forward.2} parent=5 // pred_fallthru
      _
    %p950 = scmp.le.s32.totalorder 2, %s10
    // Predicated region
    $region37: #{pool_bn_forward.2} parent=5 // pred_check
      %p951 = pneg %p950
    $region38: #{pool_bn_forward.2} parent=5 // pred_check_branch
      %953 = sbr.rel (%p951) target = $region40
    $region39: #{pool_bn_forward.2} parent=5 // pred_region
      %s954 = ssub.s32 %s10, 2
      // Predicated region
      $region41: #{pool_bn_forward.2} parent=39 // pred_check
        %p955 = pneg %p86
      $region42: #{pool_bn_forward.2} parent=39 // pred_check_branch
        %957 = sbr.rel (%p955) target = $region44
      $region43: #{pool_bn_forward.2} parent=39 // pred_region
        %p958 = scmp.lt.s32.totalorder %s16, 1
        %s959 = scalar_select %p958, %s16, 1
        %s960 = smul.addr %s959, 32
        %s961 = smul.addr %s960, 8
        %s962 = scalar_lea.vmem %s2, %s961
      $region44: #{pool_bn_forward.2} parent=39 // pred_fallthru
        _
      // Predicated region
      $region45: #{pool_bn_forward.2} parent=39 // pred_check
        %p963 = pneg %p112
      $region46: #{pool_bn_forward.2} parent=39 // pred_check_branch
        %965 = sbr.rel (%p963) target = $region48
      $region47: #{pool_bn_forward.2} parent=39 // pred_region
        %p966 = scmp.lt.s32.totalorder %s16, 1
        %s967 = scalar_select %p966, %s16, 1
        %s968 = smul.addr %s967, 2
        %s969 = scalar_lea.vmem %s3, %s968
      $region48: #{pool_bn_forward.2} parent=39 // pred_fallthru
        _
    $region40: #{pool_bn_forward.2} parent=5 // pred_fallthru
      _
  $region6: #{pool_bn_forward.2} parent=0 // loop_footer
    %s14 = sadd.s32 1, %s10
  $region7: #{pool_bn_forward.2} parent=0 // loop_footer_branch
    %9 = sbr.rel target = $region3
  $region8: #{pool_bn_forward.2} parent=0 // loop_exit
    _

</llo_original>
